<compile_context>
chip_gen: v7x
topology: tpu7x:2x2x1
jax: 0.10.0
libtpu: 0.0.40
codegen_flags: <defaults>
</compile_context>

<pallas_src>
import functools

import jax
import jax.numpy as jnp
from jax.experimental import pallas as pl
from jax.experimental.pallas import tpu as pltpu


def mha_kernel(q_ref, k_ref, v_ref,
               wq_ref, wk_ref, wv_ref,
               bq_ref, bk_ref, bv_ref,
               wp_ref, bp_ref,
               o_ref,
               cat_ref,
               *, num_heads, head_size):
    """One grid step == one batch element.

    q/k/v refs: (1, T, C) bf16; fused weights (C, C) bf16; biases (1, C) f32;
    cat_ref: (T, C) bf16 VMEM scratch holding the concatenated head outputs.
    """
    q = q_ref[0]   # (T, C) bf16
    k = k_ref[0]
    v = v_ref[0]

    # Fused, lane-dense QKV projections (bf16 operands, f32 accumulate).
    q_proj = jnp.dot(q, wq_ref[...], preferred_element_type=jnp.float32) + bq_ref[...]
    k_proj = jnp.dot(k, wk_ref[...], preferred_element_type=jnp.float32) + bk_ref[...]
    v_proj = jnp.dot(v, wv_ref[...], preferred_element_type=jnp.float32) + bv_ref[...]

    # Fold 1/sqrt(head_size) into Q: T*C multiplies instead of T*T per head.
    scale = float(head_size) ** -0.5
    q_proj = q_proj * jnp.float32(scale)

    q_bf = q_proj.astype(jnp.bfloat16)
    k_bf = k_proj.astype(jnp.bfloat16)
    v_bf = v_proj.astype(jnp.bfloat16)

    # Static unrolled head loop (num_heads is small); all slices are static
    # lane-offset slices, so they cost nothing at runtime.
    for h in range(num_heads):
        sl = slice(h * head_size, (h + 1) * head_size)
        qh = q_bf[:, sl]                          # (T, hs)
        kh = k_bf[:, sl]
        vh = v_bf[:, sl]

        # scores = qh @ kh^T expressed as a contraction (no transpose).
        s = jax.lax.dot_general(qh, kh, (((1,), (1,)), ((), ())),
                                preferred_element_type=jnp.float32)   # (T, T)
        m = jnp.max(s, axis=-1, keepdims=True)                        # XLU reduce
        p = jnp.exp(s - m)                                            # EUP
        r = jnp.sum(p, axis=-1, keepdims=True)                        # (T, 1)

        acc = jnp.dot(p.astype(jnp.bfloat16), vh,
                      preferred_element_type=jnp.float32)             # (T, hs)
        # Deferred softmax normalization on (T, hs) via approx reciprocal (EUP).
        attn_h = acc * pl.reciprocal(r, approx=True)

        # Write this head's output at its lane offset: "concatenation" is free
        # and the head accumulator is dead immediately after the store.
        cat_ref[:, sl] = attn_h.astype(cat_ref.dtype)

    # Output projection: single lane-dense (T, C) @ (C, C) matmul (full-depth
    # contraction over C -> best MXU utilization for the projection).
    out = jnp.dot(cat_ref[...], wp_ref[...],
                  preferred_element_type=jnp.float32) + bp_ref[...]
    # Dropout on the projected output: identity in eval mode.
    o_ref[0] = out.astype(o_ref.dtype)


def multi_head_attention(query, key, value, params, *, num_heads):
    """query/key/value: (B, T, C). Returns (B, T, C) in the input dtype."""
    B, T, C = query.shape
    assert C % num_heads == 0
    head_size = C // num_heads
    wq, wk, wv, bq, bk, bv, wp, bp = params
    out_dtype = query.dtype

    # bf16 matmul operands: 2x MXU throughput, half the HBM/VMEM footprint.
    cast = lambda x: x.astype(jnp.bfloat16)
    q_in, k_in, v_in = cast(query), cast(key), cast(value)
    wq_in, wk_in, wv_in, wp_in = cast(wq), cast(wk), cast(wv), cast(wp)
    # Biases stay f32: they add into the f32 accumulators.
    bq_in, bk_in, bv_in, bp_in = (b.astype(jnp.float32) for b in (bq, bk, bv, bp))

    kernel = functools.partial(mha_kernel, num_heads=num_heads, head_size=head_size)

    seq_spec = pl.BlockSpec((1, T, C), lambda b: (b, 0, 0))
    w_spec = pl.BlockSpec((C, C), lambda b: (0, 0))     # same block every step -> VMEM-resident
    b_spec = pl.BlockSpec((1, C), lambda b: (0, 0))

    # Advisory cost estimate for XLA's scheduler around the custom call.
    flops = int(2 * B * (4 * T * C * C + 2 * T * T * C))
    transcendentals = int(B * num_heads * T * T)
    bytes_accessed = int(3 * B * T * C * 2            # q/k/v in bf16
                         + 4 * C * C * 2              # fused weights in bf16
                         + 4 * C * 4                  # biases in f32
                         + B * T * C * jnp.dtype(out_dtype).itemsize)
    cost = pl.CostEstimate(flops=flops,
                           transcendentals=transcendentals,
                           bytes_accessed=bytes_accessed)

    return pl.pallas_call(
        kernel,
        out_shape=jax.ShapeDtypeStruct((B, T, C), out_dtype),
        grid_spec=pltpu.PrefetchScalarGridSpec(
            num_scalar_prefetch=0,
            grid=(B,),
            in_specs=[seq_spec, seq_spec, seq_spec,
                      w_spec, w_spec, w_spec,
                      b_spec, b_spec, b_spec,
                      w_spec, b_spec],
            out_specs=seq_spec,
            scratch_shapes=[pltpu.VMEM((T, C), jnp.bfloat16)],
        ),
        compiler_params=pltpu.CompilerParams(
            dimension_semantics=("parallel",),
            # Above the default scoped limit on v5e/v6e/v7x, but below v7x's
            # 64 MiB physical VMEM so the request can always be honored.
            vmem_limit_bytes=48 * 1024 * 1024,
        ),
        cost_estimate=cost,
    )(q_in, k_in, v_in, wq_in, wk_in, wv_in, bq_in, bk_in, bv_in, wp_in, bp_in)


def init_params(key, embed_dim, num_heads):
    """PyTorch-nn.Linear-style init (uniform +-1/sqrt(fan_in)).

    Per-head Q/K/V weights are stored FUSED as (C, C): head h occupies
    columns [h*hs, (h+1)*hs). Biases are (1, C). Projection is (C, C)/(1, C).
    """
    head_size = embed_dim // num_heads
    keys = jax.random.split(key, 8)
    bound_in = 1.0 / float(embed_dim) ** 0.5
    bound_proj = 1.0 / float(head_size * num_heads) ** 0.5

    def u(k, shape, bound):
        return jax.random.uniform(k, shape, jnp.float32, -bound, bound)

    wq = u(keys[0], (embed_dim, embed_dim), bound_in)
    wk = u(keys[1], (embed_dim, embed_dim), bound_in)
    wv = u(keys[2], (embed_dim, embed_dim), bound_in)
    bq = u(keys[3], (1, embed_dim), bound_in)
    bk = u(keys[4], (1, embed_dim), bound_in)
    bv = u(keys[5], (1, embed_dim), bound_in)
    wp = u(keys[6], (embed_dim, embed_dim), bound_proj)
    bp = u(keys[7], (1, embed_dim), bound_proj)
    return wq, wk, wv, bq, bk, bv, wp, bp


def reference_mha(query, key, value, params, *, num_heads):
    """Pure-JAX f32 reference mirroring the PyTorch module structure
    (per-head Linear -> scaled dot-product softmax -> concat -> proj)."""
    wq, wk, wv, bq, bk, bv, wp, bp = params
    C = query.shape[-1]
    hs = C // num_heads
    outs = []
    for h in range(num_heads):
        sl = slice(h * hs, (h + 1) * hs)
        qh = query @ wq[:, sl] + bq[:, sl]
        kh = key @ wk[:, sl] + bk[:, sl]
        vh = value @ wv[:, sl] + bv[:, sl]
        scores = (qh @ jnp.swapaxes(kh, -1, -2)) * (hs ** -0.5)
        p = jax.nn.softmax(scores, axis=-1)
        outs.append(p @ vh)
    cat = jnp.concatenate(outs, axis=-1)
    return cat @ wp + bp


if __name__ == "__main__":
    B, T, C, H = 2, 8, 32, 4   # batch, seq_len, embed_dim, num_heads (small test shapes)

    root = jax.random.PRNGKey(0)
    kq, kk, kv, kp = jax.random.split(root, 4)
    query = jax.random.normal(kq, (B, T, C), jnp.float32)
    key = jax.random.normal(kk, (B, T, C), jnp.float32)
    value = jax.random.normal(kv, (B, T, C), jnp.float32)
    params = init_params(kp, C, H)

    out = multi_head_attention(query, key, value, params, num_heads=H)
    out = jax.block_until_ready(out)

    ref = reference_mha(query, key, value, params, num_heads=H)
    assert out.shape == (B, T, C)
    # bf16 matmul operands (f32 accumulate) vs. pure-f32 reference -> loosen tol.
    assert jnp.allclose(out, ref, atol=2e-2, rtol=2e-2)

    print("KERNEL_OK")
</pallas_src>

<mosaic_0001>
module attributes {stable_mosaic.version = 11 : i64} {
  func.func @mha_kernel(%arg0: i32, %arg1: memref<1x8x32xbf16, #tpu.memory_space<vmem>>, %arg2: memref<1x8x32xbf16, #tpu.memory_space<vmem>>, %arg3: memref<1x8x32xbf16, #tpu.memory_space<vmem>>, %arg4: memref<32x32xbf16, #tpu.memory_space<vmem>>, %arg5: memref<32x32xbf16, #tpu.memory_space<vmem>>, %arg6: memref<32x32xbf16, #tpu.memory_space<vmem>>, %arg7: memref<1x32xf32, #tpu.memory_space<vmem>>, %arg8: memref<1x32xf32, #tpu.memory_space<vmem>>, %arg9: memref<1x32xf32, #tpu.memory_space<vmem>>, %arg10: memref<32x32xbf16, #tpu.memory_space<vmem>>, %arg11: memref<1x32xf32, #tpu.memory_space<vmem>>, %arg12: memref<1x8x32xf32, #tpu.memory_space<vmem>>, %arg13: memref<8x32xbf16, #tpu.memory_space<vmem>>) attributes {dimension_semantics = [#tpu.dimension_semantics<parallel>], iteration_bounds = array<i64: 2>, scalar_prefetch = 0 : i64, scratch_operands = 1 : i64, tpu.core_type = #tpu.core_type<tc>, window_params = [{transform_indices = @transform_0, window_bounds = array<i64: 1, 8, 32>}, {transform_indices = @transform_1, window_bounds = array<i64: 1, 8, 32>}, {transform_indices = @transform_2, window_bounds = array<i64: 1, 8, 32>}, {pipeline_mode = #tpu.pipeline_mode<synchronous>, transform_indices = @transform_3, window_bounds = array<i64: 32, 32>}, {pipeline_mode = #tpu.pipeline_mode<synchronous>, transform_indices = @transform_4, window_bounds = array<i64: 32, 32>}, {pipeline_mode = #tpu.pipeline_mode<synchronous>, transform_indices = @transform_5, window_bounds = array<i64: 32, 32>}, {pipeline_mode = #tpu.pipeline_mode<synchronous>, transform_indices = @transform_6, window_bounds = array<i64: 1, 32>}, {pipeline_mode = #tpu.pipeline_mode<synchronous>, transform_indices = @transform_7, window_bounds = array<i64: 1, 32>}, {pipeline_mode = #tpu.pipeline_mode<synchronous>, transform_indices = @transform_8, window_bounds = array<i64: 1, 32>}, {pipeline_mode = #tpu.pipeline_mode<synchronous>, transform_indices = @transform_9, window_bounds = array<i64: 32, 32>}, {pipeline_mode = #tpu.pipeline_mode<synchronous>, transform_indices = @transform_10, window_bounds = array<i64: 1, 32>}, {transform_indices = @transform_11, window_bounds = array<i64: 1, 8, 32>}]} {
    %c0 = arith.constant 0 : index
    %c0_0 = arith.constant 0 : index
    %c0_1 = arith.constant 0 : index
    %0 = vector.load %arg1[%c0, %c0_0, %c0_1] : memref<1x8x32xbf16, #tpu.memory_space<vmem>>, vector<1x8x32xbf16>
    %1 = vector.shape_cast %0 : vector<1x8x32xbf16> to vector<8x32xbf16>
    %c0_2 = arith.constant 0 : index
    %c0_3 = arith.constant 0 : index
    %c0_4 = arith.constant 0 : index
    %2 = vector.load %arg2[%c0_2, %c0_3, %c0_4] : memref<1x8x32xbf16, #tpu.memory_space<vmem>>, vector<1x8x32xbf16>
    %3 = vector.shape_cast %2 : vector<1x8x32xbf16> to vector<8x32xbf16>
    %c0_5 = arith.constant 0 : index
    %c0_6 = arith.constant 0 : index
    %c0_7 = arith.constant 0 : index
    %4 = vector.load %arg3[%c0_5, %c0_6, %c0_7] : memref<1x8x32xbf16, #tpu.memory_space<vmem>>, vector<1x8x32xbf16>
    %5 = vector.shape_cast %4 : vector<1x8x32xbf16> to vector<8x32xbf16>
    %c0_8 = arith.constant 0 : index
    %c0_9 = arith.constant 0 : index
    %6 = vector.load %arg4[%c0_8, %c0_9] : memref<32x32xbf16, #tpu.memory_space<vmem>>, vector<32x32xbf16>
    %cst = arith.constant dense<0.000000e+00> : vector<8x32xf32>
    %7 = tpu.matmul %1, %6, %cst {dimension_numbers = #tpu.dot_dimension_numbers<[1], [0], [0], [1], [0, 0, 1, 1], [], []>} : vector<8x32xbf16>, vector<32x32xbf16>, vector<8x32xf32> -> vector<8x32xf32>
    %c0_10 = arith.constant 0 : index
    %c0_11 = arith.constant 0 : index
    %8 = vector.load %arg7[%c0_10, %c0_11] : memref<1x32xf32, #tpu.memory_space<vmem>>, vector<1x32xf32>
    %9 = vector.broadcast %8 : vector<1x32xf32> to vector<8x32xf32>
    %10 = arith.addf %7, %9 : vector<8x32xf32>
    %c0_12 = arith.constant 0 : index
    %c0_13 = arith.constant 0 : index
    %11 = vector.load %arg5[%c0_12, %c0_13] : memref<32x32xbf16, #tpu.memory_space<vmem>>, vector<32x32xbf16>
    %cst_14 = arith.constant dense<0.000000e+00> : vector<8x32xf32>
    %12 = tpu.matmul %3, %11, %cst_14 {dimension_numbers = #tpu.dot_dimension_numbers<[1], [0], [0], [1], [0, 0, 1, 1], [], []>} : vector<8x32xbf16>, vector<32x32xbf16>, vector<8x32xf32> -> vector<8x32xf32>
    %c0_15 = arith.constant 0 : index
    %c0_16 = arith.constant 0 : index
    %13 = vector.load %arg8[%c0_15, %c0_16] : memref<1x32xf32, #tpu.memory_space<vmem>>, vector<1x32xf32>
    %14 = vector.broadcast %13 : vector<1x32xf32> to vector<8x32xf32>
    %15 = arith.addf %12, %14 : vector<8x32xf32>
    %c0_17 = arith.constant 0 : index
    %c0_18 = arith.constant 0 : index
    %16 = vector.load %arg6[%c0_17, %c0_18] : memref<32x32xbf16, #tpu.memory_space<vmem>>, vector<32x32xbf16>
    %cst_19 = arith.constant dense<0.000000e+00> : vector<8x32xf32>
    %17 = tpu.matmul %5, %16, %cst_19 {dimension_numbers = #tpu.dot_dimension_numbers<[1], [0], [0], [1], [0, 0, 1, 1], [], []>} : vector<8x32xbf16>, vector<32x32xbf16>, vector<8x32xf32> -> vector<8x32xf32>
    %c0_20 = arith.constant 0 : index
    %c0_21 = arith.constant 0 : index
    %18 = vector.load %arg9[%c0_20, %c0_21] : memref<1x32xf32, #tpu.memory_space<vmem>>, vector<1x32xf32>
    %19 = vector.broadcast %18 : vector<1x32xf32> to vector<8x32xf32>
    %20 = arith.addf %17, %19 : vector<8x32xf32>
    %cst_22 = arith.constant 0.353553385 : f32
    %21 = vector.broadcast %cst_22 : f32 to vector<8x32xf32>
    %22 = arith.mulf %10, %21 : vector<8x32xf32>
    %23 = arith.truncf %22 : vector<8x32xf32> to vector<8x32xbf16>
    %24 = arith.truncf %15 : vector<8x32xf32> to vector<8x32xbf16>
    %25 = arith.truncf %20 : vector<8x32xf32> to vector<8x32xbf16>
    %26 = vector.extract_strided_slice %23 {offsets = [0, 0], sizes = [8, 8], strides = [1, 1]} : vector<8x32xbf16> to vector<8x8xbf16>
    %27 = vector.extract_strided_slice %24 {offsets = [0, 0], sizes = [8, 8], strides = [1, 1]} : vector<8x32xbf16> to vector<8x8xbf16>
    %28 = vector.extract_strided_slice %25 {offsets = [0, 0], sizes = [8, 8], strides = [1, 1]} : vector<8x32xbf16> to vector<8x8xbf16>
    %cst_23 = arith.constant dense<0.000000e+00> : vector<8x8xf32>
    %29 = tpu.matmul %26, %27, %cst_23 {dimension_numbers = #tpu.dot_dimension_numbers<[1], [1], [0], [0], [0, 0, 1, 0], [], []>} : vector<8x8xbf16>, vector<8x8xbf16>, vector<8x8xf32> -> vector<8x8xf32>
    %cst_24 = arith.constant dense<0xFF800000> : vector<8xf32>
    %30 = vector.multi_reduction <maximumf>, %29, %cst_24 [1] : vector<8x8xf32> to vector<8xf32>
    %31 = vector.shape_cast %30 : vector<8xf32> to vector<8x1xf32>
    %32 = vector.broadcast %31 : vector<8x1xf32> to vector<8x8xf32>
    %33 = arith.subf %29, %32 : vector<8x8xf32>
    %34 = math.exp %33 : vector<8x8xf32>
    %cst_25 = arith.constant dense<0.000000e+00> : vector<8xf32>
    %35 = vector.multi_reduction <add>, %34, %cst_25 [1] : vector<8x8xf32> to vector<8xf32>
    %36 = vector.shape_cast %35 : vector<8xf32> to vector<8x1xf32>
    %37 = arith.truncf %34 : vector<8x8xf32> to vector<8x8xbf16>
    %cst_26 = arith.constant dense<0.000000e+00> : vector<8x8xf32>
    %38 = tpu.matmul %37, %28, %cst_26 {dimension_numbers = #tpu.dot_dimension_numbers<[1], [0], [0], [1], [0, 0, 1, 1], [], []>} : vector<8x8xbf16>, vector<8x8xbf16>, vector<8x8xf32> -> vector<8x8xf32>
    %39 = tpu.reciprocal %36 {approx = true} : vector<8x1xf32> -> vector<8x1xf32>
    %40 = vector.broadcast %39 : vector<8x1xf32> to vector<8x8xf32>
    %41 = arith.mulf %38, %40 : vector<8x8xf32>
    %42 = arith.truncf %41 : vector<8x8xf32> to vector<8x8xbf16>
    %c0_27 = arith.constant 0 : index
    %c0_28 = arith.constant 0 : index
    %43 = vector.load %arg13[%c0_27, %c0_28] : memref<8x32xbf16, #tpu.memory_space<vmem>>, vector<8x8xbf16>
    tpu.vector_store %arg13[%c0_27, %c0_28], %42 {strides = array<i32>} : memref<8x32xbf16, #tpu.memory_space<vmem>>, vector<8x8xbf16>,
    %44 = vector.extract_strided_slice %23 {offsets = [0, 8], sizes = [8, 8], strides = [1, 1]} : vector<8x32xbf16> to vector<8x8xbf16>
    %45 = vector.extract_strided_slice %24 {offsets = [0, 8], sizes = [8, 8], strides = [1, 1]} : vector<8x32xbf16> to vector<8x8xbf16>
    %46 = vector.extract_strided_slice %25 {offsets = [0, 8], sizes = [8, 8], strides = [1, 1]} : vector<8x32xbf16> to vector<8x8xbf16>
    %cst_29 = arith.constant dense<0.000000e+00> : vector<8x8xf32>
    %47 = tpu.matmul %44, %45, %cst_29 {dimension_numbers = #tpu.dot_dimension_numbers<[1], [1], [0], [0], [0, 0, 1, 0], [], []>} : vector<8x8xbf16>, vector<8x8xbf16>, vector<8x8xf32> -> vector<8x8xf32>
    %cst_30 = arith.constant dense<0xFF800000> : vector<8xf32>
    %48 = vector.multi_reduction <maximumf>, %47, %cst_30 [1] : vector<8x8xf32> to vector<8xf32>
    %49 = vector.shape_cast %48 : vector<8xf32> to vector<8x1xf32>
    %50 = vector.broadcast %49 : vector<8x1xf32> to vector<8x8xf32>
    %51 = arith.subf %47, %50 : vector<8x8xf32>
    %52 = math.exp %51 : vector<8x8xf32>
    %cst_31 = arith.constant dense<0.000000e+00> : vector<8xf32>
    %53 = vector.multi_reduction <add>, %52, %cst_31 [1] : vector<8x8xf32> to vector<8xf32>
    %54 = vector.shape_cast %53 : vector<8xf32> to vector<8x1xf32>
    %55 = arith.truncf %52 : vector<8x8xf32> to vector<8x8xbf16>
    %cst_32 = arith.constant dense<0.000000e+00> : vector<8x8xf32>
    %56 = tpu.matmul %55, %46, %cst_32 {dimension_numbers = #tpu.dot_dimension_numbers<[1], [0], [0], [1], [0, 0, 1, 1], [], []>} : vector<8x8xbf16>, vector<8x8xbf16>, vector<8x8xf32> -> vector<8x8xf32>
    %57 = tpu.reciprocal %54 {approx = true} : vector<8x1xf32> -> vector<8x1xf32>
    %58 = vector.broadcast %57 : vector<8x1xf32> to vector<8x8xf32>
    %59 = arith.mulf %56, %58 : vector<8x8xf32>
    %60 = arith.truncf %59 : vector<8x8xf32> to vector<8x8xbf16>
    %c0_33 = arith.constant 0 : index
    %c8 = arith.constant 8 : index
    %61 = vector.load %arg13[%c0_33, %c8] : memref<8x32xbf16, #tpu.memory_space<vmem>>, vector<8x8xbf16>
    tpu.vector_store %arg13[%c0_33, %c8], %60 {strides = array<i32>} : memref<8x32xbf16, #tpu.memory_space<vmem>>, vector<8x8xbf16>,
    %62 = vector.extract_strided_slice %23 {offsets = [0, 16], sizes = [8, 8], strides = [1, 1]} : vector<8x32xbf16> to vector<8x8xbf16>
    %63 = vector.extract_strided_slice %24 {offsets = [0, 16], sizes = [8, 8], strides = [1, 1]} : vector<8x32xbf16> to vector<8x8xbf16>
    %64 = vector.extract_strided_slice %25 {offsets = [0, 16], sizes = [8, 8], strides = [1, 1]} : vector<8x32xbf16> to vector<8x8xbf16>
    %cst_34 = arith.constant dense<0.000000e+00> : vector<8x8xf32>
    %65 = tpu.matmul %62, %63, %cst_34 {dimension_numbers = #tpu.dot_dimension_numbers<[1], [1], [0], [0], [0, 0, 1, 0], [], []>} : vector<8x8xbf16>, vector<8x8xbf16>, vector<8x8xf32> -> vector<8x8xf32>
    %cst_35 = arith.constant dense<0xFF800000> : vector<8xf32>
    %66 = vector.multi_reduction <maximumf>, %65, %cst_35 [1] : vector<8x8xf32> to vector<8xf32>
    %67 = vector.shape_cast %66 : vector<8xf32> to vector<8x1xf32>
    %68 = vector.broadcast %67 : vector<8x1xf32> to vector<8x8xf32>
    %69 = arith.subf %65, %68 : vector<8x8xf32>
    %70 = math.exp %69 : vector<8x8xf32>
    %cst_36 = arith.constant dense<0.000000e+00> : vector<8xf32>
    %71 = vector.multi_reduction <add>, %70, %cst_36 [1] : vector<8x8xf32> to vector<8xf32>
    %72 = vector.shape_cast %71 : vector<8xf32> to vector<8x1xf32>
    %73 = arith.truncf %70 : vector<8x8xf32> to vector<8x8xbf16>
    %cst_37 = arith.constant dense<0.000000e+00> : vector<8x8xf32>
    %74 = tpu.matmul %73, %64, %cst_37 {dimension_numbers = #tpu.dot_dimension_numbers<[1], [0], [0], [1], [0, 0, 1, 1], [], []>} : vector<8x8xbf16>, vector<8x8xbf16>, vector<8x8xf32> -> vector<8x8xf32>
    %75 = tpu.reciprocal %72 {approx = true} : vector<8x1xf32> -> vector<8x1xf32>
    %76 = vector.broadcast %75 : vector<8x1xf32> to vector<8x8xf32>
    %77 = arith.mulf %74, %76 : vector<8x8xf32>
    %78 = arith.truncf %77 : vector<8x8xf32> to vector<8x8xbf16>
    %c0_38 = arith.constant 0 : index
    %c16 = arith.constant 16 : index
    %79 = vector.load %arg13[%c0_38, %c16] : memref<8x32xbf16, #tpu.memory_space<vmem>>, vector<8x8xbf16>
    tpu.vector_store %arg13[%c0_38, %c16], %78 {strides = array<i32>} : memref<8x32xbf16, #tpu.memory_space<vmem>>, vector<8x8xbf16>,
    %80 = vector.extract_strided_slice %23 {offsets = [0, 24], sizes = [8, 8], strides = [1, 1]} : vector<8x32xbf16> to vector<8x8xbf16>
    %81 = vector.extract_strided_slice %24 {offsets = [0, 24], sizes = [8, 8], strides = [1, 1]} : vector<8x32xbf16> to vector<8x8xbf16>
    %82 = vector.extract_strided_slice %25 {offsets = [0, 24], sizes = [8, 8], strides = [1, 1]} : vector<8x32xbf16> to vector<8x8xbf16>
    %cst_39 = arith.constant dense<0.000000e+00> : vector<8x8xf32>
    %83 = tpu.matmul %80, %81, %cst_39 {dimension_numbers = #tpu.dot_dimension_numbers<[1], [1], [0], [0], [0, 0, 1, 0], [], []>} : vector<8x8xbf16>, vector<8x8xbf16>, vector<8x8xf32> -> vector<8x8xf32>
    %cst_40 = arith.constant dense<0xFF800000> : vector<8xf32>
    %84 = vector.multi_reduction <maximumf>, %83, %cst_40 [1] : vector<8x8xf32> to vector<8xf32>
    %85 = vector.shape_cast %84 : vector<8xf32> to vector<8x1xf32>
    %86 = vector.broadcast %85 : vector<8x1xf32> to vector<8x8xf32>
    %87 = arith.subf %83, %86 : vector<8x8xf32>
    %88 = math.exp %87 : vector<8x8xf32>
    %cst_41 = arith.constant dense<0.000000e+00> : vector<8xf32>
    %89 = vector.multi_reduction <add>, %88, %cst_41 [1] : vector<8x8xf32> to vector<8xf32>
    %90 = vector.shape_cast %89 : vector<8xf32> to vector<8x1xf32>
    %91 = arith.truncf %88 : vector<8x8xf32> to vector<8x8xbf16>
    %cst_42 = arith.constant dense<0.000000e+00> : vector<8x8xf32>
    %92 = tpu.matmul %91, %82, %cst_42 {dimension_numbers = #tpu.dot_dimension_numbers<[1], [0], [0], [1], [0, 0, 1, 1], [], []>} : vector<8x8xbf16>, vector<8x8xbf16>, vector<8x8xf32> -> vector<8x8xf32>
    %93 = tpu.reciprocal %90 {approx = true} : vector<8x1xf32> -> vector<8x1xf32>
    %94 = vector.broadcast %93 : vector<8x1xf32> to vector<8x8xf32>
    %95 = arith.mulf %92, %94 : vector<8x8xf32>
    %96 = arith.truncf %95 : vector<8x8xf32> to vector<8x8xbf16>
    %c0_43 = arith.constant 0 : index
    %c24 = arith.constant 24 : index
    %97 = vector.load %arg13[%c0_43, %c24] : memref<8x32xbf16, #tpu.memory_space<vmem>>, vector<8x8xbf16>
    tpu.vector_store %arg13[%c0_43, %c24], %96 {strides = array<i32>} : memref<8x32xbf16, #tpu.memory_space<vmem>>, vector<8x8xbf16>,
    %c0_44 = arith.constant 0 : index
    %c0_45 = arith.constant 0 : index
    %98 = vector.load %arg13[%c0_44, %c0_45] : memref<8x32xbf16, #tpu.memory_space<vmem>>, vector<8x32xbf16>
    %c0_46 = arith.constant 0 : index
    %c0_47 = arith.constant 0 : index
    %99 = vector.load %arg10[%c0_46, %c0_47] : memref<32x32xbf16, #tpu.memory_space<vmem>>, vector<32x32xbf16>
    %cst_48 = arith.constant dense<0.000000e+00> : vector<8x32xf32>
    %100 = tpu.matmul %98, %99, %cst_48 {dimension_numbers = #tpu.dot_dimension_numbers<[1], [0], [0], [1], [0, 0, 1, 1], [], []>} : vector<8x32xbf16>, vector<32x32xbf16>, vector<8x32xf32> -> vector<8x32xf32>
    %c0_49 = arith.constant 0 : index
    %c0_50 = arith.constant 0 : index
    %101 = vector.load %arg11[%c0_49, %c0_50] : memref<1x32xf32, #tpu.memory_space<vmem>>, vector<1x32xf32>
    %102 = vector.broadcast %101 : vector<1x32xf32> to vector<8x32xf32>
    %103 = arith.addf %100, %102 : vector<8x32xf32>
    %c0_51 = arith.constant 0 : index
    %c0_52 = arith.constant 0 : index
    %c0_53 = arith.constant 0 : index
    %104 = vector.load %arg12[%c0_51, %c0_52, %c0_53] : memref<1x8x32xf32, #tpu.memory_space<vmem>>, vector<1x8x32xf32>
    %105 = vector.shape_cast %104 : vector<1x8x32xf32> to vector<8x32xf32>
    %106 = vector.shape_cast %103 : vector<8x32xf32> to vector<1x8x32xf32>
    tpu.vector_store %arg12[%c0_51, %c0_52, %c0_53], %106 {strides = array<i32>} : memref<1x8x32xf32, #tpu.memory_space<vmem>>, vector<1x8x32xf32>,
    return
  }
  func.func @transform_0(%arg0: i32) -> (i32, i32, i32) {
    %c0_i32 = arith.constant 0 : i32
    %c0_i32_0 = arith.constant 0 : i32
    %c0_i32_1 = arith.constant 0 : i32
    return %arg0, %c0_i32, %c0_i32_0 : i32, i32, i32
  }
  func.func @transform_1(%arg0: i32) -> (i32, i32, i32) {
    %c0_i32 = arith.constant 0 : i32
    %c0_i32_0 = arith.constant 0 : i32
    %c0_i32_1 = arith.constant 0 : i32
    return %arg0, %c0_i32, %c0_i32_0 : i32, i32, i32
  }
  func.func @transform_2(%arg0: i32) -> (i32, i32, i32) {
    %c0_i32 = arith.constant 0 : i32
    %c0_i32_0 = arith.constant 0 : i32
    %c0_i32_1 = arith.constant 0 : i32
    return %arg0, %c0_i32, %c0_i32_0 : i32, i32, i32
  }
  func.func @transform_3(%arg0: i32) -> (i32, i32) {
    %c0_i32 = arith.constant 0 : i32
    %c0_i32_0 = arith.constant 0 : i32
    %c0_i32_1 = arith.constant 0 : i32
    return %c0_i32, %c0_i32_0 : i32, i32
  }
  func.func @transform_4(%arg0: i32) -> (i32, i32) {
    %c0_i32 = arith.constant 0 : i32
    %c0_i32_0 = arith.constant 0 : i32
    %c0_i32_1 = arith.constant 0 : i32
    return %c0_i32, %c0_i32_0 : i32, i32
  }
  func.func @transform_5(%arg0: i32) -> (i32, i32) {
    %c0_i32 = arith.constant 0 : i32
    %c0_i32_0 = arith.constant 0 : i32
    %c0_i32_1 = arith.constant 0 : i32
    return %c0_i32, %c0_i32_0 : i32, i32
  }
  func.func @transform_6(%arg0: i32) -> (i32, i32) {
    %c0_i32 = arith.constant 0 : i32
    %c0_i32_0 = arith.constant 0 : i32
    %c0_i32_1 = arith.constant 0 : i32
    return %c0_i32, %c0_i32_0 : i32, i32
  }
  func.func @transform_7(%arg0: i32) -> (i32, i32) {
    %c0_i32 = arith.constant 0 : i32
    %c0_i32_0 = arith.constant 0 : i32
    %c0_i32_1 = arith.constant 0 : i32
    return %c0_i32, %c0_i32_0 : i32, i32
  }
  func.func @transform_8(%arg0: i32) -> (i32, i32) {
    %c0_i32 = arith.constant 0 : i32
    %c0_i32_0 = arith.constant 0 : i32
    %c0_i32_1 = arith.constant 0 : i32
    return %c0_i32, %c0_i32_0 : i32, i32
  }
  func.func @transform_9(%arg0: i32) -> (i32, i32) {
    %c0_i32 = arith.constant 0 : i32
    %c0_i32_0 = arith.constant 0 : i32
    %c0_i32_1 = arith.constant 0 : i32
    return %c0_i32, %c0_i32_0 : i32, i32
  }
  func.func @transform_10(%arg0: i32) -> (i32, i32) {
    %c0_i32 = arith.constant 0 : i32
    %c0_i32_0 = arith.constant 0 : i32
    %c0_i32_1 = arith.constant 0 : i32
    return %c0_i32, %c0_i32_0 : i32, i32
  }
  func.func @transform_11(%arg0: i32) -> (i32, i32, i32) {
    %c0_i32 = arith.constant 0 : i32
    %c0_i32_0 = arith.constant 0 : i32
    %c0_i32_1 = arith.constant 0 : i32
    return %arg0, %c0_i32, %c0_i32_0 : i32, i32, i32
  }
}

</mosaic_0001>

<llo_original>
// kernel: tpu_custom_call.1
$region0: #{tpu_custom_call.1}
  #allocation0 [shape = 'u32[]', space=smem, size = 0x4, offset = 0x4, fixed_abs, tag = 'smem constant byte address 0x4 - core index']
  #allocation1 [shape = 'u32[144,128]{1,0:T(1,128)}', space=vmem, size = 0x12000, scoped, tag = 'internal scratch']
  #allocation2 [shape = 'bf16[8,32]{1,0:T(8,128)(2,1)}', space=vmem, size = 0x800, scoped, tag = 'scratch operand']
  %s0 = inlined_call_operand.hbm [shape: bf16[2,8,32], index: 0, kind: input, shape index: {}]
  %s1 = inlined_call_operand.hbm [shape: bf16[2,8,32], index: 1, kind: input, shape index: {}]
  %s2 = inlined_call_operand.hbm [shape: bf16[2,8,32], index: 2, kind: input, shape index: {}]
  %s3 = inlined_call_operand.hbm [shape: bf16[32,32], index: 3, kind: input, shape index: {}]
  %s4 = inlined_call_operand.hbm [shape: bf16[32,32], index: 4, kind: input, shape index: {}]
  %s5 = inlined_call_operand.vmem [shape: bf16[32,32], index: 5, kind: input, shape index: {}]
  %s6 = inlined_call_operand.vmem [shape: f32[1,32], index: 6, kind: input, shape index: {}]
  %s7 = inlined_call_operand.vmem [shape: f32[1,32], index: 7, kind: input, shape index: {}]
  %s8 = inlined_call_operand.hbm [shape: f32[1,32], index: 8, kind: input, shape index: {}]
  %s9 = inlined_call_operand.vmem [shape: bf16[32,32], index: 9, kind: input, shape index: {}]
  %s10 = inlined_call_operand.vmem [shape: f32[1,32], index: 10, kind: input, shape index: {}]
  %s11 = inlined_call_operand.hbm [shape: f32[2,8,32], index: 11, kind: output, shape index: {}]
  %s12 = sld [smem:[#allocation0]]
  $region101: #{tpu_custom_call.1} parent=0
    _
  %s14 = ssub.s32 1, %s12
  %s15 = scalar_select 0, %s14, %s12
  $region1: #{tpu_custom_call.1} parent=0
    #allocation3 [shape = 'u8[4096]{0}', space=vmem, size = 0x1000, scoped, tag = 'input window, operand 0']
    #allocation4 [shape = 's32[2]{0}', space=sflag, size = 0x8, scoped, tag = 'scoped memory for tpu_custom_call.1']
    #allocation5 [shape = 's32[2]{0}', space=sflag, size = 0x8, scoped, tag = 'scoped memory for tpu_custom_call.1']
    #allocation6 [shape = 'u8[4096]{0}', space=vmem, size = 0x1000, scoped, tag = 'input window, operand 1']
    #allocation7 [shape = 's32[2]{0}', space=sflag, size = 0x8, scoped, tag = 'scoped memory for tpu_custom_call.1']
    #allocation8 [shape = 'u8[4096]{0}', space=vmem, size = 0x1000, scoped, tag = 'input window, operand 2']
    #allocation9 [shape = 'u8[8192]{0}', space=vmem, size = 0x2000, scoped, tag = 'input window, operand 3, single buffered']
    #allocation10 [shape = 's32[1]{0}', space=sflag, size = 0x4, scoped, tag = 'scoped memory for tpu_custom_call.1']
    #allocation11 [shape = 'u8[8192]{0}', space=vmem, size = 0x2000, scoped, tag = 'input window, operand 4, single buffered']
    #allocation12 [shape = 'u8[512]{0}', space=vmem, size = 0x400, scoped, tag = 'input window, operand 8, single buffered']
    #allocation13 [shape = 's32[1]{0}', space=sflag, size = 0x4, scoped, tag = 'scoped memory for tpu_custom_call.1']
    #allocation14 [shape = 'u8[8192]{0}', space=vmem, size = 0x2000, scoped, tag = 'output window, operand 0']
    %16 = vsyncpa [#allocation4], 0
    %s17 = scalar_lea.sflag [#allocation4], 1
    %18 = vsyncpa %s17, 0
    %19 = vsyncpa [#allocation7], 0
    %s20 = scalar_lea.sflag [#allocation7], 1
    %21 = vsyncpa %s20, 0
    %22 = vsyncpa [#allocation10], 0
    %23 = vsyncpa [#allocation13], 0
    %24 = vsyncpa [#allocation5], 0
    %s25 = scalar_lea.sflag [#allocation5], 1
    %26 = vsyncpa %s25, 0
    loop: start=0, step=1, limit=4
    $region2: #{tpu_custom_call.1} parent=1 // loop_pre_header
      _
    $region3: #{tpu_custom_call.1} parent=1 // loop_header
      %s28 = sphi 0, %s32
      %p29 = scmp.ge.s32.totalorder %s28, 4
      %s38 = sphi 0, %s40
      %s41 = sphi 0, %s38
      %s42 = sphi 0, %s41
      %s58 = sphi 0, %s42
      %s64 = sphi 0, %s66
      %s67 = sphi 0, %s64
      %s68 = sphi 0, %s67
      %s84 = sphi 0, %s68
      %s90 = sphi 0, %s92
      %s93 = sphi 0, %s90
      %s94 = sphi 0, %s93
      %s110 = sphi 0, %s94
      %s114 = sphi 0, %s114
      %s116 = sphi 0, %s114
      %s117 = sphi 0, %s116
      %s131 = sphi 0, %s117
      %s135 = sphi 0, %s135
      %s137 = sphi 0, %s135
      %s138 = sphi 0, %s137
      %s152 = sphi 0, %s138
      %s156 = sphi 0, %s156
      %s158 = sphi 0, %s156
      %s159 = sphi 0, %s158
      %s173 = sphi 0, %s159
      %s177 = sphi 0, %s177
      %s179 = sphi 0, %s177
      %s180 = sphi 0, %s179
      %s194 = sphi 0, %s180
      %s198 = sphi 0, %s198
      %s200 = sphi 0, %s198
      %s201 = sphi 0, %s200
      %s215 = sphi 0, %s201
      %s219 = sphi 0, %s219
      %s221 = sphi 0, %s219
      %s222 = sphi 0, %s221
      %s236 = sphi 0, %s222
      %s240 = sphi 0, %s240
      %s242 = sphi 0, %s240
      %s243 = sphi 0, %s242
      %s257 = sphi 0, %s243
      %s261 = sphi 0, %s261
      %s263 = sphi 0, %s261
      %s264 = sphi 0, %s263
      %s278 = sphi 0, %s264
      %s284 = sphi 0, %s286
      %s287 = sphi 0, %s284
      %s288 = sphi 0, %s287
      %s304 = sphi 0, %s288
    $region4: #{tpu_custom_call.1} parent=1 // loop_header_branch
      %31 = sbr.rel (%p29) target = $region8
    $region5: #{tpu_custom_call.1} parent=1 // loop_body
      %s33 = ssub.s32 %s28, 1
      %s34 = ssub.s32 %s28, 2
      %s35 = sadd.s32 %s28, 1
      %s36 = ssub.s32 %s28, %s35
      %p37 = scmp.eq.s32.totalorder %s36, 0
      %s39 = sadd.s32 %s38, 1
      %s40 = scalar_select %p37, %s38, %s39
      %p43 = pneg %p37
      %p44 = scmp.eq.s32.totalorder %s28, 1
      %p45 = por %p43, %p44
      %p46 = scmp.ne.s32.totalorder %s38, %s41
      %p47 = scmp.eq.s32.totalorder %s28, 0
      %p48 = por %p46, %p47
      %p49 = scmp.ne.s32.totalorder %s38, %s41
      %p50 = scmp.eq.s32.totalorder %s33, 1
      %p51 = por %p49, %p50
      %p52 = scmp.ne.s32.totalorder %s41, %s42
      %p53 = scmp.eq.s32.totalorder %s33, 0
      %p54 = por %p52, %p53
      %p55 = scmp.ne.s32.totalorder %s41, %s42
      %p56 = scmp.eq.s32.totalorder %s34, 1
      %p57 = por %p55, %p56
      %p59 = scmp.ne.s32.totalorder %s42, %s58
      %p60 = scmp.eq.s32.totalorder %s34, 0
      %p61 = por %p59, %p60
      %s62 = ssub.s32 %s28, %s35
      %p63 = scmp.eq.s32.totalorder %s62, 0
      %s65 = sadd.s32 %s64, 1
      %s66 = scalar_select %p63, %s64, %s65
      %p69 = pneg %p63
      %p70 = scmp.eq.s32.totalorder %s28, 1
      %p71 = por %p69, %p70
      %p72 = scmp.ne.s32.totalorder %s64, %s67
      %p73 = scmp.eq.s32.totalorder %s28, 0
      %p74 = por %p72, %p73
      %p75 = scmp.ne.s32.totalorder %s64, %s67
      %p76 = scmp.eq.s32.totalorder %s33, 1
      %p77 = por %p75, %p76
      %p78 = scmp.ne.s32.totalorder %s67, %s68
      %p79 = scmp.eq.s32.totalorder %s33, 0
      %p80 = por %p78, %p79
      %p81 = scmp.ne.s32.totalorder %s67, %s68
      %p82 = scmp.eq.s32.totalorder %s34, 1
      %p83 = por %p81, %p82
      %p85 = scmp.ne.s32.totalorder %s68, %s84
      %p86 = scmp.eq.s32.totalorder %s34, 0
      %p87 = por %p85, %p86
      %s88 = ssub.s32 %s28, %s35
      %p89 = scmp.eq.s32.totalorder %s88, 0
      %s91 = sadd.s32 %s90, 1
      %s92 = scalar_select %p89, %s90, %s91
      %p95 = pneg %p89
      %p96 = scmp.eq.s32.totalorder %s28, 1
      %p97 = por %p95, %p96
      %p98 = scmp.ne.s32.totalorder %s90, %s93
      %p99 = scmp.eq.s32.totalorder %s28, 0
      %p100 = por %p98, %p99
      %p101 = scmp.ne.s32.totalorder %s90, %s93
      %p102 = scmp.eq.s32.totalorder %s33, 1
      %p103 = por %p101, %p102
      %p104 = scmp.ne.s32.totalorder %s93, %s94
      %p105 = scmp.eq.s32.totalorder %s33, 0
      %p106 = por %p104, %p105
      %p107 = scmp.ne.s32.totalorder %s93, %s94
      %p108 = scmp.eq.s32.totalorder %s34, 1
      %p109 = por %p107, %p108
      %p111 = scmp.ne.s32.totalorder %s94, %s110
      %p112 = scmp.eq.s32.totalorder %s34, 0
      %p113 = por %p111, %p112
      %s115 = sadd.s32 %s114, 1
      %p118 = scmp.eq.s32.totalorder %s28, 1
      %p119 = scmp.ne.s32.totalorder %s114, %s116
      %p120 = scmp.eq.s32.totalorder %s28, 0
      %p121 = por %p119, %p120
      %p122 = scmp.ne.s32.totalorder %s114, %s116
      %p123 = scmp.eq.s32.totalorder %s33, 1
      %p124 = por %p122, %p123
      %p125 = scmp.ne.s32.totalorder %s116, %s117
      %p126 = scmp.eq.s32.totalorder %s33, 0
      %p127 = por %p125, %p126
      %p128 = scmp.ne.s32.totalorder %s116, %s117
      %p129 = scmp.eq.s32.totalorder %s34, 1
      %p130 = por %p128, %p129
      %p132 = scmp.ne.s32.totalorder %s117, %s131
      %p133 = scmp.eq.s32.totalorder %s34, 0
      %p134 = por %p132, %p133
      %s136 = sadd.s32 %s135, 1
      %p139 = scmp.eq.s32.totalorder %s28, 1
      %p140 = scmp.ne.s32.totalorder %s135, %s137
      %p141 = scmp.eq.s32.totalorder %s28, 0
      %p142 = por %p140, %p141
      %p143 = scmp.ne.s32.totalorder %s135, %s137
      %p144 = scmp.eq.s32.totalorder %s33, 1
      %p145 = por %p143, %p144
      %p146 = scmp.ne.s32.totalorder %s137, %s138
      %p147 = scmp.eq.s32.totalorder %s33, 0
      %p148 = por %p146, %p147
      %p149 = scmp.ne.s32.totalorder %s137, %s138
      %p150 = scmp.eq.s32.totalorder %s34, 1
      %p151 = por %p149, %p150
      %p153 = scmp.ne.s32.totalorder %s138, %s152
      %p154 = scmp.eq.s32.totalorder %s34, 0
      %p155 = por %p153, %p154
      %s157 = sadd.s32 %s156, 1
      %p160 = scmp.eq.s32.totalorder %s28, 1
      %p161 = scmp.ne.s32.totalorder %s156, %s158
      %p162 = scmp.eq.s32.totalorder %s28, 0
      %p163 = por %p161, %p162
      %p164 = scmp.ne.s32.totalorder %s156, %s158
      %p165 = scmp.eq.s32.totalorder %s33, 1
      %p166 = por %p164, %p165
      %p167 = scmp.ne.s32.totalorder %s158, %s159
      %p168 = scmp.eq.s32.totalorder %s33, 0
      %p169 = por %p167, %p168
      %p170 = scmp.ne.s32.totalorder %s158, %s159
      %p171 = scmp.eq.s32.totalorder %s34, 1
      %p172 = por %p170, %p171
      %p174 = scmp.ne.s32.totalorder %s159, %s173
      %p175 = scmp.eq.s32.totalorder %s34, 0
      %p176 = por %p174, %p175
      %s178 = sadd.s32 %s177, 1
      %p181 = scmp.eq.s32.totalorder %s28, 1
      %p182 = scmp.ne.s32.totalorder %s177, %s179
      %p183 = scmp.eq.s32.totalorder %s28, 0
      %p184 = por %p182, %p183
      %p185 = scmp.ne.s32.totalorder %s177, %s179
      %p186 = scmp.eq.s32.totalorder %s33, 1
      %p187 = por %p185, %p186
      %p188 = scmp.ne.s32.totalorder %s179, %s180
      %p189 = scmp.eq.s32.totalorder %s33, 0
      %p190 = por %p188, %p189
      %p191 = scmp.ne.s32.totalorder %s179, %s180
      %p192 = scmp.eq.s32.totalorder %s34, 1
      %p193 = por %p191, %p192
      %p195 = scmp.ne.s32.totalorder %s180, %s194
      %p196 = scmp.eq.s32.totalorder %s34, 0
      %p197 = por %p195, %p196
      %s199 = sadd.s32 %s198, 1
      %p202 = scmp.eq.s32.totalorder %s28, 1
      %p203 = scmp.ne.s32.totalorder %s198, %s200
      %p204 = scmp.eq.s32.totalorder %s28, 0
      %p205 = por %p203, %p204
      %p206 = scmp.ne.s32.totalorder %s198, %s200
      %p207 = scmp.eq.s32.totalorder %s33, 1
      %p208 = por %p206, %p207
      %p209 = scmp.ne.s32.totalorder %s200, %s201
      %p210 = scmp.eq.s32.totalorder %s33, 0
      %p211 = por %p209, %p210
      %p212 = scmp.ne.s32.totalorder %s200, %s201
      %p213 = scmp.eq.s32.totalorder %s34, 1
      %p214 = por %p212, %p213
      %p216 = scmp.ne.s32.totalorder %s201, %s215
      %p217 = scmp.eq.s32.totalorder %s34, 0
      %p218 = por %p216, %p217
      %s220 = sadd.s32 %s219, 1
      %p223 = scmp.eq.s32.totalorder %s28, 1
      %p224 = scmp.ne.s32.totalorder %s219, %s221
      %p225 = scmp.eq.s32.totalorder %s28, 0
      %p226 = por %p224, %p225
      %p227 = scmp.ne.s32.totalorder %s219, %s221
      %p228 = scmp.eq.s32.totalorder %s33, 1
      %p229 = por %p227, %p228
      %p230 = scmp.ne.s32.totalorder %s221, %s222
      %p231 = scmp.eq.s32.totalorder %s33, 0
      %p232 = por %p230, %p231
      %p233 = scmp.ne.s32.totalorder %s221, %s222
      %p234 = scmp.eq.s32.totalorder %s34, 1
      %p235 = por %p233, %p234
      %p237 = scmp.ne.s32.totalorder %s222, %s236
      %p238 = scmp.eq.s32.totalorder %s34, 0
      %p239 = por %p237, %p238
      %s241 = sadd.s32 %s240, 1
      %p244 = scmp.eq.s32.totalorder %s28, 1
      %p245 = scmp.ne.s32.totalorder %s240, %s242
      %p246 = scmp.eq.s32.totalorder %s28, 0
      %p247 = por %p245, %p246
      %p248 = scmp.ne.s32.totalorder %s240, %s242
      %p249 = scmp.eq.s32.totalorder %s33, 1
      %p250 = por %p248, %p249
      %p251 = scmp.ne.s32.totalorder %s242, %s243
      %p252 = scmp.eq.s32.totalorder %s33, 0
      %p253 = por %p251, %p252
      %p254 = scmp.ne.s32.totalorder %s242, %s243
      %p255 = scmp.eq.s32.totalorder %s34, 1
      %p256 = por %p254, %p255
      %p258 = scmp.ne.s32.totalorder %s243, %s257
      %p259 = scmp.eq.s32.totalorder %s34, 0
      %p260 = por %p258, %p259
      %s262 = sadd.s32 %s261, 1
      %p265 = scmp.eq.s32.totalorder %s28, 1
      %p266 = scmp.ne.s32.totalorder %s261, %s263
      %p267 = scmp.eq.s32.totalorder %s28, 0
      %p268 = por %p266, %p267
      %p269 = scmp.ne.s32.totalorder %s261, %s263
      %p270 = scmp.eq.s32.totalorder %s33, 1
      %p271 = por %p269, %p270
      %p272 = scmp.ne.s32.totalorder %s263, %s264
      %p273 = scmp.eq.s32.totalorder %s33, 0
      %p274 = por %p272, %p273
      %p275 = scmp.ne.s32.totalorder %s263, %s264
      %p276 = scmp.eq.s32.totalorder %s34, 1
      %p277 = por %p275, %p276
      %p279 = scmp.ne.s32.totalorder %s264, %s278
      %p280 = scmp.eq.s32.totalorder %s34, 0
      %p281 = por %p279, %p280
      %s282 = ssub.s32 %s28, %s35
      %p283 = scmp.eq.s32.totalorder %s282, 0
      %s285 = sadd.s32 %s284, 1
      %s286 = scalar_select %p283, %s284, %s285
      %p289 = pneg %p283
      %p290 = scmp.eq.s32.totalorder %s28, 1
      %p291 = por %p289, %p290
      %p292 = scmp.ne.s32.totalorder %s284, %s287
      %p293 = scmp.eq.s32.totalorder %s28, 0
      %p294 = por %p292, %p293
      %p295 = scmp.ne.s32.totalorder %s284, %s287
      %p296 = scmp.eq.s32.totalorder %s33, 1
      %p297 = por %p295, %p296
      %p298 = scmp.ne.s32.totalorder %s287, %s288
      %p299 = scmp.eq.s32.totalorder %s33, 0
      %p300 = por %p298, %p299
      %p301 = scmp.ne.s32.totalorder %s287, %s288
      %p302 = scmp.eq.s32.totalorder %s34, 1
      %p303 = por %p301, %p302
      %p305 = scmp.ne.s32.totalorder %s288, %s304
      %p306 = scmp.eq.s32.totalorder %s34, 0
      %p307 = por %p305, %p306
      %p308 = scmp.le.s32.totalorder 1, %s28
      %p309 = scmp.lt.s32.totalorder %s28, 3
      %p310 = pnand %p308, %p309
      %p311 = pneg %p310
      // Predicated region
      $region9: #{tpu_custom_call.1} parent=5 // pred_check
        _
      $region10: #{tpu_custom_call.1} parent=5 // pred_check_branch
        %313 = sbr.rel (%p310) target = $region12
      $region11: #{tpu_custom_call.1} parent=5 // pred_region
        %s314 = ssub.s32 %s28, 1
        // Predicated region
        $region13: #{tpu_custom_call.1} parent=11 // pred_check
          %p315 = pneg %p127
        $region14: #{tpu_custom_call.1} parent=11 // pred_check_branch
          %317 = sbr.rel (%p315) target = $region16
        $region15: #{tpu_custom_call.1} parent=11 // pred_region
          %s319 = ssub.s32 256, 256
          %320 = vsyncadd [#allocation10], %s319
          %s321 = sshll.u32 [#allocation9], 4
          %s322 = int_to_ptr.vmem [resolvable:$true] %s321
          %327 = dma.hbm_to_vmem [thread:$0]  %s3, 256, %s322, [#allocation10], 64, 64, 4
        $region16: #{tpu_custom_call.1} parent=11 // pred_fallthru
          _
        // Predicated region
        $region17: #{tpu_custom_call.1} parent=11 // pred_check
          %p328 = pneg %p148
        $region18: #{tpu_custom_call.1} parent=11 // pred_check_branch
          %330 = sbr.rel (%p328) target = $region20
        $region19: #{tpu_custom_call.1} parent=11 // pred_region
          %s332 = ssub.s32 256, 256
          %333 = vsyncadd [#allocation10], %s332
          %s334 = sshll.u32 [#allocation11], 4
          %s335 = int_to_ptr.vmem [resolvable:$true] %s334
          %340 = dma.hbm_to_vmem [thread:$0]  %s4, 256, %s335, [#allocation10], 64, 64, 4
        $region20: #{tpu_custom_call.1} parent=11 // pred_fallthru
          _
        // Predicated region
        $region21: #{tpu_custom_call.1} parent=11 // pred_check
          %p341 = pneg %p169
        $region22: #{tpu_custom_call.1} parent=11 // pred_check_branch
          %343 = sbr.rel (%p341) target = $region24
        $region23: #{tpu_custom_call.1} parent=11 // pred_region
          _
        $region24: #{tpu_custom_call.1} parent=11 // pred_fallthru
          _
        // Predicated region
        $region25: #{tpu_custom_call.1} parent=11 // pred_check
          %p344 = pneg %p190
        $region26: #{tpu_custom_call.1} parent=11 // pred_check_branch
          %346 = sbr.rel (%p344) target = $region28
        $region27: #{tpu_custom_call.1} parent=11 // pred_region
          _
        $region28: #{tpu_custom_call.1} parent=11 // pred_fallthru
          _
        // Predicated region
        $region29: #{tpu_custom_call.1} parent=11 // pred_check
          %p347 = pneg %p211
        $region30: #{tpu_custom_call.1} parent=11 // pred_check_branch
          %349 = sbr.rel (%p347) target = $region32
        $region31: #{tpu_custom_call.1} parent=11 // pred_region
          _
        $region32: #{tpu_custom_call.1} parent=11 // pred_fallthru
          _
        // Predicated region
        $region33: #{tpu_custom_call.1} parent=11 // pred_check
          %p350 = pneg %p232
        $region34: #{tpu_custom_call.1} parent=11 // pred_check_branch
          %352 = sbr.rel (%p350) target = $region36
        $region35: #{tpu_custom_call.1} parent=11 // pred_region
          %s354 = ssub.s32 16, 16
          %355 = vsyncadd [#allocation13], %s354
          %s357 = sshll.u32 [#allocation12], 4
          %s358 = int_to_ptr.vmem [resolvable:$true] %s357
          %360 = dma.hbm_to_vmem [thread:$0]  %s8, 16, %s358, [#allocation13]
        $region36: #{tpu_custom_call.1} parent=11 // pred_fallthru
          _
        // Predicated region
        $region37: #{tpu_custom_call.1} parent=11 // pred_check
          %p361 = pneg %p253
        $region38: #{tpu_custom_call.1} parent=11 // pred_check_branch
          %363 = sbr.rel (%p361) target = $region40
        $region39: #{tpu_custom_call.1} parent=11 // pred_region
          _
        $region40: #{tpu_custom_call.1} parent=11 // pred_fallthru
          _
        // Predicated region
        $region41: #{tpu_custom_call.1} parent=11 // pred_check
          %p364 = pneg %p274
        $region42: #{tpu_custom_call.1} parent=11 // pred_check_branch
          %366 = sbr.rel (%p364) target = $region44
        $region43: #{tpu_custom_call.1} parent=11 // pred_region
          _
        $region44: #{tpu_custom_call.1} parent=11 // pred_fallthru
          _
      $region12: #{tpu_custom_call.1} parent=5 // pred_fallthru
        _
      %p367 = scmp.lt.s32.totalorder %s28, 2
      // Predicated region
      $region45: #{tpu_custom_call.1} parent=5 // pred_check
        %p368 = pneg %p367
      $region46: #{tpu_custom_call.1} parent=5 // pred_check_branch
        %370 = sbr.rel (%p368) target = $region48
      $region47: #{tpu_custom_call.1} parent=5 // pred_region
        // Predicated region
        $region49: #{tpu_custom_call.1} parent=47 // pred_check
          %p371 = pneg %p48
        $region50: #{tpu_custom_call.1} parent=47 // pred_check_branch
          %373 = sbr.rel (%p371) target = $region52
        $region51: #{tpu_custom_call.1} parent=47 // pred_region
          %s374 = sand.u32 %s38, 1
          %s375 = scalar_lea.sflag [#allocation4], %s374
          %s376 = sand.u32 %s38, 1
          %s377 = smul.addr %s376, 4
          %s378 = scalar_lea.vmem [#allocation3], %s377
          %s380 = ssub.s32 64, 64
          %381 = vsyncadd %s375, %s380
          %s382 = smul.addr %s28, 64
          %s383 = scalar_lea.hbm %s0, %s382
          %s385 = sshll.u32 %s378, 4
          %s386 = int_to_ptr.vmem [resolvable:$true] %s385
          %388 = dma.hbm_to_vmem [thread:$0]  %s383, 64, %s386, %s375
        $region52: #{tpu_custom_call.1} parent=47 // pred_fallthru
          _
        // Predicated region
        $region53: #{tpu_custom_call.1} parent=47 // pred_check
          %p389 = pneg %p74
        $region54: #{tpu_custom_call.1} parent=47 // pred_check_branch
          %391 = sbr.rel (%p389) target = $region56
        $region55: #{tpu_custom_call.1} parent=47 // pred_region
          %s392 = sand.u32 %s28, 1
          %s393 = scalar_lea.sflag [#allocation7], %s392
          %s394 = sand.u32 %s64, 1
          %s395 = smul.addr %s394, 4
          %s396 = scalar_lea.vmem [#allocation6], %s395
          %s398 = ssub.s32 64, 64
          %399 = vsyncadd %s393, %s398
          %s400 = smul.addr %s28, 64
          %s401 = scalar_lea.hbm %s1, %s400
          %s403 = sshll.u32 %s396, 4
          %s404 = int_to_ptr.vmem [resolvable:$true] %s403
          %406 = dma.hbm_to_vmem [thread:$0]  %s401, 64, %s404, %s393
        $region56: #{tpu_custom_call.1} parent=47 // pred_fallthru
          _
        // Predicated region
        $region57: #{tpu_custom_call.1} parent=47 // pred_check
          %p407 = pneg %p100
        $region58: #{tpu_custom_call.1} parent=47 // pred_check_branch
          %409 = sbr.rel (%p407) target = $region60
        $region59: #{tpu_custom_call.1} parent=47 // pred_region
          %s410 = sand.u32 %s28, 1
          %s411 = scalar_lea.sflag [#allocation7], %s410
          %s412 = sand.u32 %s90, 1
          %s413 = smul.addr %s412, 4
          %s414 = scalar_lea.vmem [#allocation8], %s413
          %s416 = ssub.s32 64, 64
          %417 = vsyncadd %s411, %s416
          %s418 = smul.addr %s28, 64
          %s419 = scalar_lea.hbm %s2, %s418
          %s421 = sshll.u32 %s414, 4
          %s422 = int_to_ptr.vmem [resolvable:$true] %s421
          %424 = dma.hbm_to_vmem [thread:$0]  %s419, 64, %s422, %s411
        $region60: #{tpu_custom_call.1} parent=47 // pred_fallthru
          _
      $region48: #{tpu_custom_call.1} parent=5 // pred_fallthru
        _
      %p425 = scmp.le.s32.totalorder 1, %s28
      %p426 = scmp.lt.s32.totalorder %s28, 3
      %p427 = pnand %p425, %p426
      %p428 = pneg %p427
      // Predicated region
      $region61: #{tpu_custom_call.1} parent=5 // pred_check
        _
      $region62: #{tpu_custom_call.1} parent=5 // pred_check_branch
        %430 = sbr.rel (%p427) target = $region64
      $region63: #{tpu_custom_call.1} parent=5 // pred_region
        %s431 = ssub.s32 %s28, 1
        %s432 = sand.u32 %s41, 1
        %s433 = scalar_lea.sflag [#allocation4], %s432
        %s434 = sand.u32 %s41, 1
        %s435 = smul.addr %s434, 4
        %s436 = scalar_lea.vmem [#allocation3], %s435
        // Predicated region
        $region65: #{tpu_custom_call.1} parent=63 // pred_check
          %p437 = pneg %p54
        $region66: #{tpu_custom_call.1} parent=63 // pred_check_branch
          %439 = sbr.rel (%p437) target = $region68
        $region67: #{tpu_custom_call.1} parent=63 // pred_region
          %440 = dma.done %s433, 64
        $region68: #{tpu_custom_call.1} parent=63 // pred_fallthru
          _
        %s441 = sand.u32 %s33, 1
        %s442 = scalar_lea.sflag [#allocation7], %s441
        %s443 = sand.u32 %s67, 1
        %s444 = smul.addr %s443, 4
        %s445 = scalar_lea.vmem [#allocation6], %s444
        // Predicated region
        $region69: #{tpu_custom_call.1} parent=63 // pred_check
          %p446 = pneg %p80
        $region70: #{tpu_custom_call.1} parent=63 // pred_check_branch
          %448 = sbr.rel (%p446) target = $region72
        $region71: #{tpu_custom_call.1} parent=63 // pred_region
          %449 = dma.done %s442, 64
        $region72: #{tpu_custom_call.1} parent=63 // pred_fallthru
          _
        %s450 = sand.u32 %s33, 1
        %s451 = scalar_lea.sflag [#allocation7], %s450
        %s452 = sand.u32 %s93, 1
        %s453 = smul.addr %s452, 4
        %s454 = scalar_lea.vmem [#allocation8], %s453
        // Predicated region
        $region73: #{tpu_custom_call.1} parent=63 // pred_check
          %p455 = pneg %p106
        $region74: #{tpu_custom_call.1} parent=63 // pred_check_branch
          %457 = sbr.rel (%p455) target = $region76
        $region75: #{tpu_custom_call.1} parent=63 // pred_region
          %458 = dma.done %s451, 64
        $region76: #{tpu_custom_call.1} parent=63 // pred_fallthru
          _
        // Predicated region
        $region77: #{tpu_custom_call.1} parent=63 // pred_check
          %p459 = pneg %p127
        $region78: #{tpu_custom_call.1} parent=63 // pred_check_branch
          %461 = sbr.rel (%p459) target = $region80
        $region79: #{tpu_custom_call.1} parent=63 // pred_region
          %462 = dma.done [#allocation10], 256
        $region80: #{tpu_custom_call.1} parent=63 // pred_fallthru
          _
        // Predicated region
        $region81: #{tpu_custom_call.1} parent=63 // pred_check
          %p463 = pneg %p148
        $region82: #{tpu_custom_call.1} parent=63 // pred_check_branch
          %465 = sbr.rel (%p463) target = $region84
        $region83: #{tpu_custom_call.1} parent=63 // pred_region
          %466 = dma.done [#allocation10], 256
        $region84: #{tpu_custom_call.1} parent=63 // pred_fallthru
          _
        // Predicated region
        $region85: #{tpu_custom_call.1} parent=63 // pred_check
          %p467 = pneg %p232
        $region86: #{tpu_custom_call.1} parent=63 // pred_check_branch
          %469 = sbr.rel (%p467) target = $region88
        $region87: #{tpu_custom_call.1} parent=63 // pred_region
          %470 = dma.done [#allocation13], 16
        $region88: #{tpu_custom_call.1} parent=63 // pred_fallthru
          _
        %s471 = sand.u32 %s41, 1
        %s472 = scalar_lea.sflag [#allocation4], %s471
        %s473 = sand.u32 %s41, 1
        %s474 = smul.addr %s473, 4
        %s475 = scalar_lea.vmem [#allocation3], %s474
        %p476 = pneg %p54
        %p477 = pneg %p51
        %s478 = sand.u32 %s33, 1
        %s479 = scalar_lea.sflag [#allocation7], %s478
        %s480 = sand.u32 %s67, 1
        %s481 = smul.addr %s480, 4
        %s482 = scalar_lea.vmem [#allocation6], %s481
        %p483 = pneg %p80
        %p484 = pneg %p77
        %s485 = sand.u32 %s33, 1
        %s486 = scalar_lea.sflag [#allocation7], %s485
        %s487 = sand.u32 %s93, 1
        %s488 = smul.addr %s487, 4
        %s489 = scalar_lea.vmem [#allocation8], %s488
        %p490 = pneg %p106
        %p491 = pneg %p103
        %p492 = pneg %p127
        %p493 = pneg %p124
        %p494 = pneg %p148
        %p495 = pneg %p145
        %p496 = pneg %p169
        %p497 = pneg %p166
        %p498 = pneg %p190
        %p499 = pneg %p187
        %p500 = pneg %p211
        %p501 = pneg %p208
        %p502 = pneg %p232
        %p503 = pneg %p229
        %p504 = pneg %p253
        %p505 = pneg %p250
        %p506 = pneg %p274
        %p507 = pneg %p271
        %p508 = pneg %p300
        %p509 = pneg %p297
        %s510 = sand.u32 %s287, 1
        %s511 = scalar_lea.sflag [#allocation5], %s510
        %s512 = sand.u32 %s287, 1
        %s513 = smul.addr %s512, 8
        %s514 = scalar_lea.vmem [#allocation14], %s513
        %v516 = vld [vmem:[%s436] sm:$0xf]
        %v517 = vld [vmem:[%s445] sm:$0xf]
        %v518 = vld [vmem:[%s454] sm:$0xf]
        %v519 = vld [vmem:[#allocation9] sm:$0xf]
        %v520 = vld [vmem:[#allocation9 + $0x4] sm:$0xf]
        %v521 = vld [vmem:[#allocation9 + $0x8] sm:$0xf]
        %v522 = vld [vmem:[#allocation9 + $0xc] sm:$0xf]
        %v523 = vld [vmem:[%s6] sm:$0x1]
        %v525 = vlaneseq
        %v526 = vshrl.u32 %v525, 7
        %v527 = vsub.s32 0, %v526
        %v528 = vrot.slane %v523, %v527
        %v534 = vunpack.c.l.b16 %v519
        %v535 = vunpack.c.l.b16 %v520
        %v536 = vunpack.c.l.b16 %v521
        %v537 = vunpack.c.l.b16 %v522
        %v538 = vpack.c.b16 %v535, %v534
        %v539 = vpack.c.b16 %v537, %v536
        %vm542 = vcmask 261120
        %v544 = vsel %vm542, %v516, 0
        %546 = vmatprep.subr.bf16.mxu0 0
        %547 = vmatpush1.bf16.msra.mxu0 %v538
        %548 = vmatprep.subr.bf16.mxu0 0
        %549 = vmatpush1.bf16.msra.mxu0 %v539
        %550 = vmatprep.subr.bf16.mxu0 0
        %551 = vmatpush1.bf16.msra.mxu0 0
        %552 = vmatprep.subr.bf16.mxu0 0
        %553 = vmatpush1.bf16.msra.mxu0 0
        %554 = vmatprep.subr.bf16.mxu0 0
        %555 = vmatpush1.bf16.msra.mxu0 0
        %556 = vmatprep.subr.bf16.mxu0 0
        %557 = vmatpush1.bf16.msra.mxu0 0
        %558 = vmatprep.subr.bf16.mxu0 0
        %559 = vmatpush1.bf16.msra.mxu0 0
        %560 = vmatprep.subr.bf16.mxu0 0
        %561 = vmatpush1.bf16.msra.mxu0 0
        %562 = vmatprep.subr.bf16.mxu0 0
        %563 = vmatpush1.bf16.msra.mxu0 0
        %564 = vmatprep.subr.bf16.mxu0 0
        %565 = vmatpush1.bf16.msra.mxu0 0
        %566 = vmatprep.subr.bf16.mxu0 0
        %567 = vmatpush1.bf16.msra.mxu0 0
        %568 = vmatprep.subr.bf16.mxu0 0
        %569 = vmatpush1.bf16.msra.mxu0 0
        %570 = vmatprep.subr.bf16.mxu0 0
        %571 = vmatpush1.bf16.msra.mxu0 0
        %572 = vmatprep.subr.bf16.mxu0 0
        %573 = vmatpush1.bf16.msra.mxu0 0
        %574 = vmatprep.subr.bf16.mxu0 0
        %575 = vmatpush1.bf16.msra.mxu0 0
        %576 = vmatprep.subr.bf16.mxu0 0
        %577 = vmatpush1.bf16.msra.mxu0 0
        %578 = vmatprep.mubr.bf16.mxu0 0
        %579 = vmatmul.mubr.bf16.gmra.mrb[0].mxu0 %v544
        %v580 = vpop.f32.mrb[0].mxu0
        %v581 = vadd.f32 %v528, %v580
        %v582 = vpop.f32.mrb[0].mxu0
        %v583 = vpop.f32.mrb[0].mxu0
        %v584 = vpop.f32.mrb[0].mxu0
        %585 = vdwg.mxu0
        %v586 = vld [vmem:[#allocation11] sm:$0xf]
        %v587 = vld [vmem:[#allocation11 + $0x4] sm:$0xf]
        %v588 = vld [vmem:[#allocation11 + $0x8] sm:$0xf]
        %v589 = vld [vmem:[#allocation11 + $0xc] sm:$0xf]
        %v590 = vld [vmem:[%s7] sm:$0x1]
        %v592 = vlaneseq
        %v593 = vshrl.u32 %v592, 7
        %v594 = vsub.s32 0, %v593
        %v595 = vrot.slane %v590, %v594
        %v601 = vunpack.c.l.b16 %v586
        %v602 = vunpack.c.l.b16 %v587
        %v603 = vunpack.c.l.b16 %v588
        %v604 = vunpack.c.l.b16 %v589
        %v605 = vpack.c.b16 %v602, %v601
        %v606 = vpack.c.b16 %v604, %v603
        %v610 = vsel %vm542, %v517, 0
        %612 = vmatprep.subr.bf16.mxu0 0
        %613 = vmatpush1.bf16.msra.mxu0 %v605
        %614 = vmatprep.subr.bf16.mxu0 0
        %615 = vmatpush1.bf16.msra.mxu0 %v606
        %616 = vmatprep.subr.bf16.mxu0 0
        %617 = vmatpush1.bf16.msra.mxu0 0
        %618 = vmatprep.subr.bf16.mxu0 0
        %619 = vmatpush1.bf16.msra.mxu0 0
        %620 = vmatprep.subr.bf16.mxu0 0
        %621 = vmatpush1.bf16.msra.mxu0 0
        %622 = vmatprep.subr.bf16.mxu0 0
        %623 = vmatpush1.bf16.msra.mxu0 0
        %624 = vmatprep.subr.bf16.mxu0 0
        %625 = vmatpush1.bf16.msra.mxu0 0
        %626 = vmatprep.subr.bf16.mxu0 0
        %627 = vmatpush1.bf16.msra.mxu0 0
        %628 = vmatprep.subr.bf16.mxu0 0
        %629 = vmatpush1.bf16.msra.mxu0 0
        %630 = vmatprep.subr.bf16.mxu0 0
        %631 = vmatpush1.bf16.msra.mxu0 0
        %632 = vmatprep.subr.bf16.mxu0 0
        %633 = vmatpush1.bf16.msra.mxu0 0
        %634 = vmatprep.subr.bf16.mxu0 0
        %635 = vmatpush1.bf16.msra.mxu0 0
        %636 = vmatprep.subr.bf16.mxu0 0
        %637 = vmatpush1.bf16.msra.mxu0 0
        %638 = vmatprep.subr.bf16.mxu0 0
        %639 = vmatpush1.bf16.msra.mxu0 0
        %640 = vmatprep.subr.bf16.mxu0 0
        %641 = vmatpush1.bf16.msra.mxu0 0
        %642 = vmatprep.subr.bf16.mxu0 0
        %643 = vmatpush1.bf16.msra.mxu0 0
        %644 = vmatprep.mubr.bf16.mxu0 0
        %645 = vmatmul.mubr.bf16.gmra.mrb[0].mxu0 %v610
        %v646 = vpop.f32.mrb[0].mxu0
        %v647 = vadd.f32 %v595, %v646
        %v648 = vpop.f32.mrb[0].mxu0
        %v649 = vpop.f32.mrb[0].mxu0
        %v650 = vpop.f32.mrb[0].mxu0
        %651 = vdwg.mxu0
        %v652 = vld [vmem:[%s5] sm:$0xf]
        %v653 = vld [vmem:[%s5 + $0x4] sm:$0xf]
        %v654 = vld [vmem:[%s5 + $0x8] sm:$0xf]
        %v655 = vld [vmem:[%s5 + $0xc] sm:$0xf]
        %v656 = vld [vmem:[#allocation12] sm:$0x1]
        %v658 = vlaneseq
        %v659 = vshrl.u32 %v658, 7
        %v660 = vsub.s32 0, %v659
        %v661 = vrot.slane %v656, %v660
        %v667 = vunpack.c.l.b16 %v652
        %v668 = vunpack.c.l.b16 %v653
        %v669 = vunpack.c.l.b16 %v654
        %v670 = vunpack.c.l.b16 %v655
        %v671 = vpack.c.b16 %v668, %v667
        %v672 = vpack.c.b16 %v670, %v669
        %v676 = vsel %vm542, %v518, 0
        %678 = vmatprep.subr.bf16.mxu0 0
        %679 = vmatpush1.bf16.msra.mxu0 %v671
        %680 = vmatprep.subr.bf16.mxu0 0
        %681 = vmatpush1.bf16.msra.mxu0 %v672
        %682 = vmatprep.subr.bf16.mxu0 0
        %683 = vmatpush1.bf16.msra.mxu0 0
        %684 = vmatprep.subr.bf16.mxu0 0
        %685 = vmatpush1.bf16.msra.mxu0 0
        %686 = vmatprep.subr.bf16.mxu0 0
        %687 = vmatpush1.bf16.msra.mxu0 0
        %688 = vmatprep.subr.bf16.mxu0 0
        %689 = vmatpush1.bf16.msra.mxu0 0
        %690 = vmatprep.subr.bf16.mxu0 0
        %691 = vmatpush1.bf16.msra.mxu0 0
        %692 = vmatprep.subr.bf16.mxu0 0
        %693 = vmatpush1.bf16.msra.mxu0 0
        %694 = vmatprep.subr.bf16.mxu0 0
        %695 = vmatpush1.bf16.msra.mxu0 0
        %696 = vmatprep.subr.bf16.mxu0 0
        %697 = vmatpush1.bf16.msra.mxu0 0
        %698 = vmatprep.subr.bf16.mxu0 0
        %699 = vmatpush1.bf16.msra.mxu0 0
        %700 = vmatprep.subr.bf16.mxu0 0
        %701 = vmatpush1.bf16.msra.mxu0 0
        %702 = vmatprep.subr.bf16.mxu0 0
        %703 = vmatpush1.bf16.msra.mxu0 0
        %704 = vmatprep.subr.bf16.mxu0 0
        %705 = vmatpush1.bf16.msra.mxu0 0
        %706 = vmatprep.subr.bf16.mxu0 0
        %707 = vmatpush1.bf16.msra.mxu0 0
        %708 = vmatprep.subr.bf16.mxu0 0
        %709 = vmatpush1.bf16.msra.mxu0 0
        %710 = vmatprep.mubr.bf16.mxu0 0
        %711 = vmatmul.mubr.bf16.gmra.mrb[0].mxu0 %v676
        %v712 = vpop.f32.mrb[0].mxu0
        %v713 = vadd.f32 %v661, %v712
        %v714 = vpop.f32.mrb[0].mxu0
        %v715 = vpop.f32.mrb[0].mxu0
        %v716 = vpop.f32.mrb[0].mxu0
        %717 = vdwg.mxu0
        %v718 = vmul.f32 %v581, 0.35355338
        %v719 = vpack.c.bf16 %v718, %v718
        %v720 = vpack.c.bf16 %v647, %v647
        %v721 = vpack.c.bf16 %v713, %v713
        %vm722 = vcmask 64512
        %v724 = vsel %vm722, %v719, 0
        %v727 = vsel %vm722, %v720, 0
        %729 = vmatprep.subr.bf16.mxu0 0
        %730 = vmatpush1.bf16.xpose.msra.mxu0 %v727
        %731 = vmatprep.subr.bf16.mxu0 0
        %732 = vmatpush1.bf16.xpose.msra.mxu0 0
        %733 = vmatprep.subr.bf16.mxu0 0
        %734 = vmatpush1.bf16.xpose.msra.mxu0 0
        %735 = vmatprep.subr.bf16.mxu0 0
        %736 = vmatpush1.bf16.xpose.msra.mxu0 0
        %737 = vmatprep.subr.bf16.mxu0 0
        %738 = vmatpush1.bf16.xpose.msra.mxu0 0
        %739 = vmatprep.subr.bf16.mxu0 0
        %740 = vmatpush1.bf16.xpose.msra.mxu0 0
        %741 = vmatprep.subr.bf16.mxu0 0
        %742 = vmatpush1.bf16.xpose.msra.mxu0 0
        %743 = vmatprep.subr.bf16.mxu0 0
        %744 = vmatpush1.bf16.xpose.msra.mxu0 0
        %745 = vmatprep.subr.bf16.mxu0 0
        %746 = vmatpush1.bf16.xpose.msra.mxu0 0
        %747 = vmatprep.subr.bf16.mxu0 0
        %748 = vmatpush1.bf16.xpose.msra.mxu0 0
        %749 = vmatprep.subr.bf16.mxu0 0
        %750 = vmatpush1.bf16.xpose.msra.mxu0 0
        %751 = vmatprep.subr.bf16.mxu0 0
        %752 = vmatpush1.bf16.xpose.msra.mxu0 0
        %753 = vmatprep.subr.bf16.mxu0 0
        %754 = vmatpush1.bf16.xpose.msra.mxu0 0
        %755 = vmatprep.subr.bf16.mxu0 0
        %756 = vmatpush1.bf16.xpose.msra.mxu0 0
        %757 = vmatprep.subr.bf16.mxu0 0
        %758 = vmatpush1.bf16.xpose.msra.mxu0 0
        %759 = vmatprep.subr.bf16.mxu0 0
        %760 = vmatpush1.bf16.xpose.msra.mxu0 0
        %761 = vmatprep.mubr.bf16.mxu0 0
        %762 = vmatmul.mubr.bf16.gmra.mrb[0].mxu0 %v724
        %v763 = vpop.f32.mrb[0].mxu0
        %v764 = vadd.f32 0.0, %v763
        %v765 = vpop.f32.mrb[0].mxu0
        %v766 = vpop.f32.mrb[0].mxu0
        %v767 = vpop.f32.mrb[0].mxu0
        %768 = vdwg.mxu0
        %v769 = vsel %vm722, %v764, -inf
        %770 = vmax.xlane.f32.xlu0 %v769
        %v771 = vpop.xlane.xlu0 %770
        %v772 = vsub.f32 %v764, %v771
        %v773 = vmul.f32 %v772, 1.442695
        %v774 = vpow.pop %v773
        %v775 = vsel %vm722, %v774, 0.0
        %776 = vadd.xlane.f32.xlu0 %v775
        %v777 = vpop.xlane.xlu0 %776
        %v778 = vpack.c.bf16 %v774, %v774
        %v780 = vsel %vm722, %v778, 0
        %vm782 = vcmask 1043456
        %v784 = vsel %vm782, %v721, 0
        %786 = vmatprep.subr.bf16.mxu0 0
        %787 = vmatpush1.bf16.msra.mxu0 %v784
        %788 = vmatprep.subr.bf16.mxu0 0
        %789 = vmatpush1.bf16.msra.mxu0 0
        %790 = vmatprep.subr.bf16.mxu0 0
        %791 = vmatpush1.bf16.msra.mxu0 0
        %792 = vmatprep.subr.bf16.mxu0 0
        %793 = vmatpush1.bf16.msra.mxu0 0
        %794 = vmatprep.subr.bf16.mxu0 0
        %795 = vmatpush1.bf16.msra.mxu0 0
        %796 = vmatprep.subr.bf16.mxu0 0
        %797 = vmatpush1.bf16.msra.mxu0 0
        %798 = vmatprep.subr.bf16.mxu0 0
        %799 = vmatpush1.bf16.msra.mxu0 0
        %800 = vmatprep.subr.bf16.mxu0 0
        %801 = vmatpush1.bf16.msra.mxu0 0
        %802 = vmatprep.subr.bf16.mxu0 0
        %803 = vmatpush1.bf16.msra.mxu0 0
        %804 = vmatprep.subr.bf16.mxu0 0
        %805 = vmatpush1.bf16.msra.mxu0 0
        %806 = vmatprep.subr.bf16.mxu0 0
        %807 = vmatpush1.bf16.msra.mxu0 0
        %808 = vmatprep.subr.bf16.mxu0 0
        %809 = vmatpush1.bf16.msra.mxu0 0
        %810 = vmatprep.subr.bf16.mxu0 0
        %811 = vmatpush1.bf16.msra.mxu0 0
        %812 = vmatprep.subr.bf16.mxu0 0
        %813 = vmatpush1.bf16.msra.mxu0 0
        %814 = vmatprep.subr.bf16.mxu0 0
        %815 = vmatpush1.bf16.msra.mxu0 0
        %816 = vmatprep.subr.bf16.mxu0 0
        %817 = vmatpush1.bf16.msra.mxu0 0
        %818 = vmatprep.mubr.bf16.mxu0 0
        %819 = vmatmul.mubr.bf16.gmra.mrb[0].mxu0 %v780
        %v820 = vpop.f32.mrb[0].mxu0
        %v821 = vadd.f32 0.0, %v820
        %v822 = vpop.f32.mrb[0].mxu0
        %v823 = vpop.f32.mrb[0].mxu0
        %v824 = vpop.f32.mrb[0].mxu0
        %825 = vdwg.mxu0
        %v826 = vrcp.pop %v777
        %v827 = vmul.f32 %v821, %v826
        %v828 = vpack.c.bf16 %v827, %v827
        %vm829 = vcmask 60416
        %830 = vst.msk [vmem:[#allocation2] sm:$0xf] %vm829, %v828
        %832 = vrot.lane.b32.xlu0 %v719, 120
        %v833 = vpop.permute.xlu0 %832
        %835 = vrot.lane.b32.xlu0 %v720, 120
        %v836 = vpop.permute.xlu0 %835
        %v838 = vsel %vm722, %v833, 0
        %v841 = vsel %vm722, %v836, 0
        %843 = vmatprep.subr.bf16.mxu0 0
        %844 = vmatpush1.bf16.xpose.msra.mxu0 %v841
        %845 = vmatprep.subr.bf16.mxu0 0
        %846 = vmatpush1.bf16.xpose.msra.mxu0 0
        %847 = vmatprep.subr.bf16.mxu0 0
        %848 = vmatpush1.bf16.xpose.msra.mxu0 0
        %849 = vmatprep.subr.bf16.mxu0 0
        %850 = vmatpush1.bf16.xpose.msra.mxu0 0
        %851 = vmatprep.subr.bf16.mxu0 0
        %852 = vmatpush1.bf16.xpose.msra.mxu0 0
        %853 = vmatprep.subr.bf16.mxu0 0
        %854 = vmatpush1.bf16.xpose.msra.mxu0 0
        %855 = vmatprep.subr.bf16.mxu0 0
        %856 = vmatpush1.bf16.xpose.msra.mxu0 0
        %857 = vmatprep.subr.bf16.mxu0 0
        %858 = vmatpush1.bf16.xpose.msra.mxu0 0
        %859 = vmatprep.subr.bf16.mxu0 0
        %860 = vmatpush1.bf16.xpose.msra.mxu0 0
        %861 = vmatprep.subr.bf16.mxu0 0
        %862 = vmatpush1.bf16.xpose.msra.mxu0 0
        %863 = vmatprep.subr.bf16.mxu0 0
        %864 = vmatpush1.bf16.xpose.msra.mxu0 0
        %865 = vmatprep.subr.bf16.mxu0 0
        %866 = vmatpush1.bf16.xpose.msra.mxu0 0
        %867 = vmatprep.subr.bf16.mxu0 0
        %868 = vmatpush1.bf16.xpose.msra.mxu0 0
        %869 = vmatprep.subr.bf16.mxu0 0
        %870 = vmatpush1.bf16.xpose.msra.mxu0 0
        %871 = vmatprep.subr.bf16.mxu0 0
        %872 = vmatpush1.bf16.xpose.msra.mxu0 0
        %873 = vmatprep.subr.bf16.mxu0 0
        %874 = vmatpush1.bf16.xpose.msra.mxu0 0
        %875 = vmatprep.mubr.bf16.mxu0 0
        %876 = vmatmul.mubr.bf16.gmra.mrb[0].mxu0 %v838
        %v877 = vpop.f32.mrb[0].mxu0
        %v878 = vadd.f32 0.0, %v877
        %v879 = vpop.f32.mrb[0].mxu0
        %v880 = vpop.f32.mrb[0].mxu0
        %v881 = vpop.f32.mrb[0].mxu0
        %882 = vdwg.mxu0
        %v883 = vsel %vm722, %v878, -inf
        %884 = vmax.xlane.f32.xlu0 %v883
        %v885 = vpop.xlane.xlu0 %884
        %v886 = vsub.f32 %v878, %v885
        %v887 = vmul.f32 %v886, 1.442695
        %v888 = vpow.pop %v887
        %v889 = vsel %vm722, %v888, 0.0
        %890 = vadd.xlane.f32.xlu0 %v889
        %v891 = vpop.xlane.xlu0 %890
        %v892 = vpack.c.bf16 %v888, %v888
        %894 = vrot.lane.b32.xlu0 %v721, 120
        %v895 = vpop.permute.xlu0 %894
        %v897 = vsel %vm722, %v892, 0
        %v900 = vsel %vm782, %v895, 0
        %902 = vmatprep.subr.bf16.mxu0 0
        %903 = vmatpush1.bf16.msra.mxu0 %v900
        %904 = vmatprep.subr.bf16.mxu0 0
        %905 = vmatpush1.bf16.msra.mxu0 0
        %906 = vmatprep.subr.bf16.mxu0 0
        %907 = vmatpush1.bf16.msra.mxu0 0
        %908 = vmatprep.subr.bf16.mxu0 0
        %909 = vmatpush1.bf16.msra.mxu0 0
        %910 = vmatprep.subr.bf16.mxu0 0
        %911 = vmatpush1.bf16.msra.mxu0 0
        %912 = vmatprep.subr.bf16.mxu0 0
        %913 = vmatpush1.bf16.msra.mxu0 0
        %914 = vmatprep.subr.bf16.mxu0 0
        %915 = vmatpush1.bf16.msra.mxu0 0
        %916 = vmatprep.subr.bf16.mxu0 0
        %917 = vmatpush1.bf16.msra.mxu0 0
        %918 = vmatprep.subr.bf16.mxu0 0
        %919 = vmatpush1.bf16.msra.mxu0 0
        %920 = vmatprep.subr.bf16.mxu0 0
        %921 = vmatpush1.bf16.msra.mxu0 0
        %922 = vmatprep.subr.bf16.mxu0 0
        %923 = vmatpush1.bf16.msra.mxu0 0
        %924 = vmatprep.subr.bf16.mxu0 0
        %925 = vmatpush1.bf16.msra.mxu0 0
        %926 = vmatprep.subr.bf16.mxu0 0
        %927 = vmatpush1.bf16.msra.mxu0 0
        %928 = vmatprep.subr.bf16.mxu0 0
        %929 = vmatpush1.bf16.msra.mxu0 0
        %930 = vmatprep.subr.bf16.mxu0 0
        %931 = vmatpush1.bf16.msra.mxu0 0
        %932 = vmatprep.subr.bf16.mxu0 0
        %933 = vmatpush1.bf16.msra.mxu0 0
        %934 = vmatprep.mubr.bf16.mxu0 0
        %935 = vmatmul.mubr.bf16.gmra.mrb[0].mxu0 %v897
        %v936 = vpop.f32.mrb[0].mxu0
        %v937 = vadd.f32 0.0, %v936
        %v938 = vpop.f32.mrb[0].mxu0
        %v939 = vpop.f32.mrb[0].mxu0
        %v940 = vpop.f32.mrb[0].mxu0
        %941 = vdwg.mxu0
        %v942 = vrcp.pop %v891
        %v943 = vmul.f32 %v937, %v942
        %v944 = vpack.c.bf16 %v943, %v943
        %v946 = vunpack.c.l.b16 %v944
        %v947 = vpack.c.b16 %v946, %v946
        %948 = vrot.lane.b32.xlu0 %v947, 8
        %v949 = vpop.permute.xlu0 %948
        %vm951 = vcmask 126016
        %952 = vst.msk [vmem:[#allocation2] sm:$0xf] %vm951, %v949
        %953 = vrot.lane.b32.xlu0 %v719, 112
        %v954 = vpop.permute.xlu0 %953
        %955 = vrot.lane.b32.xlu0 %v720, 112
        %v956 = vpop.permute.xlu0 %955
        %v958 = vsel %vm722, %v954, 0
        %v961 = vsel %vm722, %v956, 0
        %963 = vmatprep.subr.bf16.mxu0 0
        %964 = vmatpush1.bf16.xpose.msra.mxu0 %v961
        %965 = vmatprep.subr.bf16.mxu0 0
        %966 = vmatpush1.bf16.xpose.msra.mxu0 0
        %967 = vmatprep.subr.bf16.mxu0 0
        %968 = vmatpush1.bf16.xpose.msra.mxu0 0
        %969 = vmatprep.subr.bf16.mxu0 0
        %970 = vmatpush1.bf16.xpose.msra.mxu0 0
        %971 = vmatprep.subr.bf16.mxu0 0
        %972 = vmatpush1.bf16.xpose.msra.mxu0 0
        %973 = vmatprep.subr.bf16.mxu0 0
        %974 = vmatpush1.bf16.xpose.msra.mxu0 0
        %975 = vmatprep.subr.bf16.mxu0 0
        %976 = vmatpush1.bf16.xpose.msra.mxu0 0
        %977 = vmatprep.subr.bf16.mxu0 0
        %978 = vmatpush1.bf16.xpose.msra.mxu0 0
        %979 = vmatprep.subr.bf16.mxu0 0
        %980 = vmatpush1.bf16.xpose.msra.mxu0 0
        %981 = vmatprep.subr.bf16.mxu0 0
        %982 = vmatpush1.bf16.xpose.msra.mxu0 0
        %983 = vmatprep.subr.bf16.mxu0 0
        %984 = vmatpush1.bf16.xpose.msra.mxu0 0
        %985 = vmatprep.subr.bf16.mxu0 0
        %986 = vmatpush1.bf16.xpose.msra.mxu0 0
        %987 = vmatprep.subr.bf16.mxu0 0
        %988 = vmatpush1.bf16.xpose.msra.mxu0 0
        %989 = vmatprep.subr.bf16.mxu0 0
        %990 = vmatpush1.bf16.xpose.msra.mxu0 0
        %991 = vmatprep.subr.bf16.mxu0 0
        %992 = vmatpush1.bf16.xpose.msra.mxu0 0
        %993 = vmatprep.subr.bf16.mxu0 0
        %994 = vmatpush1.bf16.xpose.msra.mxu0 0
        %995 = vmatprep.mubr.bf16.mxu0 0
        %996 = vmatmul.mubr.bf16.gmra.mrb[0].mxu0 %v958
        %v997 = vpop.f32.mrb[0].mxu0
        %v998 = vadd.f32 0.0, %v997
        %v999 = vpop.f32.mrb[0].mxu0
        %v1000 = vpop.f32.mrb[0].mxu0
        %v1001 = vpop.f32.mrb[0].mxu0
        %1002 = vdwg.mxu0
        %v1003 = vsel %vm722, %v998, -inf
        %1004 = vmax.xlane.f32.xlu0 %v1003
        %v1005 = vpop.xlane.xlu0 %1004
        %v1006 = vsub.f32 %v998, %v1005
        %v1007 = vmul.f32 %v1006, 1.442695
        %v1008 = vpow.pop %v1007
        %v1009 = vsel %vm722, %v1008, 0.0
        %1010 = vadd.xlane.f32.xlu0 %v1009
        %v1011 = vpop.xlane.xlu0 %1010
        %v1012 = vpack.c.bf16 %v1008, %v1008
        %1013 = vrot.lane.b32.xlu0 %v721, 112
        %v1014 = vpop.permute.xlu0 %1013
        %v1016 = vsel %vm722, %v1012, 0
        %v1019 = vsel %vm782, %v1014, 0
        %1021 = vmatprep.subr.bf16.mxu0 0
        %1022 = vmatpush1.bf16.msra.mxu0 %v1019
        %1023 = vmatprep.subr.bf16.mxu0 0
        %1024 = vmatpush1.bf16.msra.mxu0 0
        %1025 = vmatprep.subr.bf16.mxu0 0
        %1026 = vmatpush1.bf16.msra.mxu0 0
        %1027 = vmatprep.subr.bf16.mxu0 0
        %1028 = vmatpush1.bf16.msra.mxu0 0
        %1029 = vmatprep.subr.bf16.mxu0 0
        %1030 = vmatpush1.bf16.msra.mxu0 0
        %1031 = vmatprep.subr.bf16.mxu0 0
        %1032 = vmatpush1.bf16.msra.mxu0 0
        %1033 = vmatprep.subr.bf16.mxu0 0
        %1034 = vmatpush1.bf16.msra.mxu0 0
        %1035 = vmatprep.subr.bf16.mxu0 0
        %1036 = vmatpush1.bf16.msra.mxu0 0
        %1037 = vmatprep.subr.bf16.mxu0 0
        %1038 = vmatpush1.bf16.msra.mxu0 0
        %1039 = vmatprep.subr.bf16.mxu0 0
        %1040 = vmatpush1.bf16.msra.mxu0 0
        %1041 = vmatprep.subr.bf16.mxu0 0
        %1042 = vmatpush1.bf16.msra.mxu0 0
        %1043 = vmatprep.subr.bf16.mxu0 0
        %1044 = vmatpush1.bf16.msra.mxu0 0
        %1045 = vmatprep.subr.bf16.mxu0 0
        %1046 = vmatpush1.bf16.msra.mxu0 0
        %1047 = vmatprep.subr.bf16.mxu0 0
        %1048 = vmatpush1.bf16.msra.mxu0 0
        %1049 = vmatprep.subr.bf16.mxu0 0
        %1050 = vmatpush1.bf16.msra.mxu0 0
        %1051 = vmatprep.subr.bf16.mxu0 0
        %1052 = vmatpush1.bf16.msra.mxu0 0
        %1053 = vmatprep.mubr.bf16.mxu0 0
        %1054 = vmatmul.mubr.bf16.gmra.mrb[0].mxu0 %v1016
        %v1055 = vpop.f32.mrb[0].mxu0
        %v1056 = vadd.f32 0.0, %v1055
        %v1057 = vpop.f32.mrb[0].mxu0
        %v1058 = vpop.f32.mrb[0].mxu0
        %v1059 = vpop.f32.mrb[0].mxu0
        %1060 = vdwg.mxu0
        %v1061 = vrcp.pop %v1011
        %v1062 = vmul.f32 %v1056, %v1061
        %v1063 = vpack.c.bf16 %v1062, %v1062
        %v1065 = vunpack.c.l.b16 %v1063
        %v1066 = vpack.c.b16 %v1065, %v1065
        %1067 = vrot.lane.b32.xlu0 %v1066, 16
        %v1068 = vpop.permute.xlu0 %1067
        %vm1070 = vcmask 191616
        %1071 = vst.msk [vmem:[#allocation2] sm:$0xf] %vm1070, %v1068
        %1072 = vrot.lane.b32.xlu0 %v719, 104
        %v1073 = vpop.permute.xlu0 %1072
        %1074 = vrot.lane.b32.xlu0 %v720, 104
        %v1075 = vpop.permute.xlu0 %1074
        %v1077 = vsel %vm722, %v1073, 0
        %v1080 = vsel %vm722, %v1075, 0
        %1082 = vmatprep.subr.bf16.mxu0 0
        %1083 = vmatpush1.bf16.xpose.msra.mxu0 %v1080
        %1084 = vmatprep.subr.bf16.mxu0 0
        %1085 = vmatpush1.bf16.xpose.msra.mxu0 0
        %1086 = vmatprep.subr.bf16.mxu0 0
        %1087 = vmatpush1.bf16.xpose.msra.mxu0 0
        %1088 = vmatprep.subr.bf16.mxu0 0
        %1089 = vmatpush1.bf16.xpose.msra.mxu0 0
        %1090 = vmatprep.subr.bf16.mxu0 0
        %1091 = vmatpush1.bf16.xpose.msra.mxu0 0
        %1092 = vmatprep.subr.bf16.mxu0 0
        %1093 = vmatpush1.bf16.xpose.msra.mxu0 0
        %1094 = vmatprep.subr.bf16.mxu0 0
        %1095 = vmatpush1.bf16.xpose.msra.mxu0 0
        %1096 = vmatprep.subr.bf16.mxu0 0
        %1097 = vmatpush1.bf16.xpose.msra.mxu0 0
        %1098 = vmatprep.subr.bf16.mxu0 0
        %1099 = vmatpush1.bf16.xpose.msra.mxu0 0
        %1100 = vmatprep.subr.bf16.mxu0 0
        %1101 = vmatpush1.bf16.xpose.msra.mxu0 0
        %1102 = vmatprep.subr.bf16.mxu0 0
        %1103 = vmatpush1.bf16.xpose.msra.mxu0 0
        %1104 = vmatprep.subr.bf16.mxu0 0
        %1105 = vmatpush1.bf16.xpose.msra.mxu0 0
        %1106 = vmatprep.subr.bf16.mxu0 0
        %1107 = vmatpush1.bf16.xpose.msra.mxu0 0
        %1108 = vmatprep.subr.bf16.mxu0 0
        %1109 = vmatpush1.bf16.xpose.msra.mxu0 0
        %1110 = vmatprep.subr.bf16.mxu0 0
        %1111 = vmatpush1.bf16.xpose.msra.mxu0 0
        %1112 = vmatprep.subr.bf16.mxu0 0
        %1113 = vmatpush1.bf16.xpose.msra.mxu0 0
        %1114 = vmatprep.mubr.bf16.mxu0 0
        %1115 = vmatmul.mubr.bf16.gmra.mrb[0].mxu0 %v1077
        %v1116 = vpop.f32.mrb[0].mxu0
        %v1117 = vadd.f32 0.0, %v1116
        %v1118 = vpop.f32.mrb[0].mxu0
        %v1119 = vpop.f32.mrb[0].mxu0
        %v1120 = vpop.f32.mrb[0].mxu0
        %1121 = vdwg.mxu0
        %v1122 = vsel %vm722, %v1117, -inf
        %1123 = vmax.xlane.f32.xlu0 %v1122
        %v1124 = vpop.xlane.xlu0 %1123
        %v1125 = vsub.f32 %v1117, %v1124
        %v1126 = vmul.f32 %v1125, 1.442695
        %v1127 = vpow.pop %v1126
        %v1128 = vsel %vm722, %v1127, 0.0
        %1129 = vadd.xlane.f32.xlu0 %v1128
        %v1130 = vpop.xlane.xlu0 %1129
        %v1131 = vpack.c.bf16 %v1127, %v1127
        %1132 = vrot.lane.b32.xlu0 %v721, 104
        %v1133 = vpop.permute.xlu0 %1132
        %v1135 = vsel %vm722, %v1131, 0
        %v1138 = vsel %vm782, %v1133, 0
        %1140 = vmatprep.subr.bf16.mxu0 0
        %1141 = vmatpush1.bf16.msra.mxu0 %v1138
        %1142 = vmatprep.subr.bf16.mxu0 0
        %1143 = vmatpush1.bf16.msra.mxu0 0
        %1144 = vmatprep.subr.bf16.mxu0 0
        %1145 = vmatpush1.bf16.msra.mxu0 0
        %1146 = vmatprep.subr.bf16.mxu0 0
        %1147 = vmatpush1.bf16.msra.mxu0 0
        %1148 = vmatprep.subr.bf16.mxu0 0
        %1149 = vmatpush1.bf16.msra.mxu0 0
        %1150 = vmatprep.subr.bf16.mxu0 0
        %1151 = vmatpush1.bf16.msra.mxu0 0
        %1152 = vmatprep.subr.bf16.mxu0 0
        %1153 = vmatpush1.bf16.msra.mxu0 0
        %1154 = vmatprep.subr.bf16.mxu0 0
        %1155 = vmatpush1.bf16.msra.mxu0 0
        %1156 = vmatprep.subr.bf16.mxu0 0
        %1157 = vmatpush1.bf16.msra.mxu0 0
        %1158 = vmatprep.subr.bf16.mxu0 0
        %1159 = vmatpush1.bf16.msra.mxu0 0
        %1160 = vmatprep.subr.bf16.mxu0 0
        %1161 = vmatpush1.bf16.msra.mxu0 0
        %1162 = vmatprep.subr.bf16.mxu0 0
        %1163 = vmatpush1.bf16.msra.mxu0 0
        %1164 = vmatprep.subr.bf16.mxu0 0
        %1165 = vmatpush1.bf16.msra.mxu0 0
        %1166 = vmatprep.subr.bf16.mxu0 0
        %1167 = vmatpush1.bf16.msra.mxu0 0
        %1168 = vmatprep.subr.bf16.mxu0 0
        %1169 = vmatpush1.bf16.msra.mxu0 0
        %1170 = vmatprep.subr.bf16.mxu0 0
        %1171 = vmatpush1.bf16.msra.mxu0 0
        %1172 = vmatprep.mubr.bf16.mxu0 0
        %1173 = vmatmul.mubr.bf16.gmra.mrb[0].mxu0 %v1135
        %v1174 = vpop.f32.mrb[0].mxu0
        %v1175 = vadd.f32 0.0, %v1174
        %v1176 = vpop.f32.mrb[0].mxu0
        %v1177 = vpop.f32.mrb[0].mxu0
        %v1178 = vpop.f32.mrb[0].mxu0
        %1179 = vdwg.mxu0
        %v1180 = vrcp.pop %v1130
        %v1181 = vmul.f32 %v1175, %v1180
        %v1182 = vpack.c.bf16 %v1181, %v1181
        %v1184 = vunpack.c.l.b16 %v1182
        %v1185 = vpack.c.b16 %v1184, %v1184
        %1186 = vrot.lane.b32.xlu0 %v1185, 24
        %v1187 = vpop.permute.xlu0 %1186
        %vm1189 = vcmask 257216
        %1190 = vst.msk [vmem:[#allocation2] sm:$0xf] %vm1189, %v1187
        %v1191 = vld [vmem:[#allocation2] sm:$0xf]
        %v1192 = vld [vmem:[%s9] sm:$0xf]
        %v1193 = vld [vmem:[%s9 + $0x4] sm:$0xf]
        %v1194 = vld [vmem:[%s9 + $0x8] sm:$0xf]
        %v1195 = vld [vmem:[%s9 + $0xc] sm:$0xf]
        %v1196 = vld [vmem:[%s10] sm:$0x1]
        %v1198 = vlaneseq
        %v1199 = vshrl.u32 %v1198, 7
        %v1200 = vsub.s32 0, %v1199
        %v1201 = vrot.slane %v1196, %v1200
        %v1207 = vunpack.c.l.b16 %v1192
        %v1208 = vunpack.c.l.b16 %v1193
        %v1209 = vunpack.c.l.b16 %v1194
        %v1210 = vunpack.c.l.b16 %v1195
        %v1211 = vpack.c.b16 %v1208, %v1207
        %v1212 = vpack.c.b16 %v1210, %v1209
        %v1216 = vsel %vm542, %v1191, 0
        %1218 = vmatprep.subr.bf16.mxu0 0
        %1219 = vmatpush1.bf16.msra.mxu0 %v1211
        %1220 = vmatprep.subr.bf16.mxu0 0
        %1221 = vmatpush1.bf16.msra.mxu0 %v1212
        %1222 = vmatprep.subr.bf16.mxu0 0
        %1223 = vmatpush1.bf16.msra.mxu0 0
        %1224 = vmatprep.subr.bf16.mxu0 0
        %1225 = vmatpush1.bf16.msra.mxu0 0
        %1226 = vmatprep.subr.bf16.mxu0 0
        %1227 = vmatpush1.bf16.msra.mxu0 0
        %1228 = vmatprep.subr.bf16.mxu0 0
        %1229 = vmatpush1.bf16.msra.mxu0 0
        %1230 = vmatprep.subr.bf16.mxu0 0
        %1231 = vmatpush1.bf16.msra.mxu0 0
        %1232 = vmatprep.subr.bf16.mxu0 0
        %1233 = vmatpush1.bf16.msra.mxu0 0
        %1234 = vmatprep.subr.bf16.mxu0 0
        %1235 = vmatpush1.bf16.msra.mxu0 0
        %1236 = vmatprep.subr.bf16.mxu0 0
        %1237 = vmatpush1.bf16.msra.mxu0 0
        %1238 = vmatprep.subr.bf16.mxu0 0
        %1239 = vmatpush1.bf16.msra.mxu0 0
        %1240 = vmatprep.subr.bf16.mxu0 0
        %1241 = vmatpush1.bf16.msra.mxu0 0
        %1242 = vmatprep.subr.bf16.mxu0 0
        %1243 = vmatpush1.bf16.msra.mxu0 0
        %1244 = vmatprep.subr.bf16.mxu0 0
        %1245 = vmatpush1.bf16.msra.mxu0 0
        %1246 = vmatprep.subr.bf16.mxu0 0
        %1247 = vmatpush1.bf16.msra.mxu0 0
        %1248 = vmatprep.subr.bf16.mxu0 0
        %1249 = vmatpush1.bf16.msra.mxu0 0
        %1250 = vmatprep.mubr.bf16.mxu0 0
        %1251 = vmatmul.mubr.bf16.gmra.mrb[0].mxu0 %v1216
        %v1252 = vpop.f32.mrb[0].mxu0
        %v1253 = vadd.f32 %v1201, %v1252
        %v1254 = vpop.f32.mrb[0].mxu0
        %v1255 = vpop.f32.mrb[0].mxu0
        %v1256 = vpop.f32.mrb[0].mxu0
        %1257 = vdwg.mxu0
        %1258 = vst.msk [vmem:[%s514] sm:$0xff] %vm542, %v1253
        %s1259 = sand.u32 %s287, 1
        %s1260 = scalar_lea.sflag [#allocation5], %s1259
        %s1261 = sand.u32 %s287, 1
        %s1262 = smul.addr %s1261, 8
        %s1263 = scalar_lea.vmem [#allocation14], %s1262
        // Predicated region
        $region89: #{tpu_custom_call.1} parent=63 // pred_check
          %p1264 = pneg %p297
        $region90: #{tpu_custom_call.1} parent=63 // pred_check_branch
          %1266 = sbr.rel (%p1264) target = $region92
        $region91: #{tpu_custom_call.1} parent=63 // pred_region
          %s1268 = ssub.s32 128, 128
          %1269 = vsyncadd %s1260, %s1268
          %s1270 = smul.addr %s33, 128
          %s1271 = scalar_lea.hbm %s11, %s1270
          %s1273 = sshll.u32 %s1263, 4
          %s1274 = int_to_ptr.vmem [resolvable:$true] %s1273
          %1276 = dma.vmem_to_hbm [thread:$0]  %s1274, 128, %s1271, %s1260
        $region92: #{tpu_custom_call.1} parent=63 // pred_fallthru
          _
      $region64: #{tpu_custom_call.1} parent=5 // pred_fallthru
        _
      %p1277 = scmp.le.s32.totalorder 2, %s28
      // Predicated region
      $region93: #{tpu_custom_call.1} parent=5 // pred_check
        %p1278 = pneg %p1277
      $region94: #{tpu_custom_call.1} parent=5 // pred_check_branch
        %1280 = sbr.rel (%p1278) target = $region96
      $region95: #{tpu_custom_call.1} parent=5 // pred_region
        %s1281 = ssub.s32 %s28, 2
        // Predicated region
        $region97: #{tpu_custom_call.1} parent=95 // pred_check
          %p1282 = pneg %p303
        $region98: #{tpu_custom_call.1} parent=95 // pred_check_branch
          %1284 = sbr.rel (%p1282) target = $region100
        $region99: #{tpu_custom_call.1} parent=95 // pred_region
          %s1285 = sand.u32 %s288, 1
          %s1286 = scalar_lea.sflag [#allocation5], %s1285
          %s1287 = sand.u32 %s288, 1
          %s1288 = smul.addr %s1287, 8
          %s1289 = scalar_lea.vmem [#allocation14], %s1288
          %1290 = dma.done %s1286, 128
        $region100: #{tpu_custom_call.1} parent=95 // pred_fallthru
          _
      $region96: #{tpu_custom_call.1} parent=5 // pred_fallthru
        _
    $region6: #{tpu_custom_call.1} parent=1 // loop_footer
      %s32 = sadd.s32 1, %s28
    $region7: #{tpu_custom_call.1} parent=1 // loop_footer_branch
      %27 = sbr.rel target = $region3
    $region8: #{tpu_custom_call.1} parent=1 // loop_exit
      _
    %1291 = vsyncpa [#allocation4], 1
    %s1292 = scalar_lea.sflag [#allocation4], 1
    %1293 = vsyncpa %s1292, 1
    %1294 = vsyncpa [#allocation7], 1
    %s1295 = scalar_lea.sflag [#allocation7], 1
    %1296 = vsyncpa %s1295, 1
    %1297 = vsyncpa [#allocation10], 1
    %1298 = vsyncpa [#allocation13], 1
    %1299 = vsyncpa [#allocation5], 1
    %s1300 = scalar_lea.sflag [#allocation5], 1
    %1301 = vsyncpa %s1300, 1

</llo_original>
